<compile_context>
chip_gen: v7x
topology: tpu7x:2x2x1
jax: 0.10.0
libtpu: 0.0.40
codegen_flags: <defaults>
</compile_context>

<pallas_src>
import jax
import jax.numpy as jnp
import numpy as np
from jax.experimental import pallas as pl
from jax.experimental.pallas import tpu as pltpu


def _time_enc_kernel(t_ref, e_ref, freq_ref, phase_ref, out_ref):
    # t_ref:     (block_rows, r)        f32  -- folded time values
    # e_ref:     (r, r*dim_t)           f32  -- constant 0/1 expansion matrix
    # freq_ref:  (1, r*dim_t)           f32  -- basis_freq tiled r times
    # phase_ref: (1, r*dim_t)           f32  -- phase tiled r times
    # out_ref:   (block_rows, r*dim_t)  f32  -- lane-dense output tile
    #
    # In-register lane expansion on the MXU.  Exact: each output element has
    # exactly one nonzero (1.0) contribution, and HIGHEST precision keeps the
    # f32 value intact.
    t_exp = jnp.dot(t_ref[...], e_ref[...],
                    preferred_element_type=jnp.float32,
                    precision=jax.lax.Precision.HIGHEST)
    # Single dense FMA (VPU) + cos (EUP) + one full-width dense store.
    out_ref[...] = jnp.cos(t_exp * freq_ref[...] + phase_ref[...])


def time_enc(nid, ts, basis_freq, phase, nume, *, block_rows=1024,
             lane_width=1024):
    """nid: int (N,), ts: float32 (N,) -> float32 (N, dim_t)."""
    n = int(nid.shape[0])
    dim_t = int(basis_freq.shape[0])

    # Fold factor r: r * dim_t must be a multiple of 128 (lane-dense rows).
    r = max(1, lane_width // dim_t)
    while (r * dim_t) % 128 != 0:
        r += 1
    lane_width = r * dim_t

    # Pre-fuse the scalar part into a single f32 stream (cheap XLA elementwise).
    # NOTE: jnp `//` floors, matching modern torch `//` semantics; only
    # relevant if nid can be negative.
    t = ts.astype(jnp.float32) - (nid // nume).astype(jnp.float32)      # (N,)

    # Pad N so it tiles evenly.  Clamp block_rows for small inputs, and keep
    # at least 2 grid steps for mid-size N (v7x megacore needs >=2 to shard).
    rows_needed = -(-n // r)
    tgt = min(block_rows, rows_needed)
    if rows_needed >= 16:
        tgt = min(tgt, -(-rows_needed // 2))
    block_rows = max(8, ((tgt + 7) // 8) * 8)
    rows_pad = -(-rows_needed // block_rows) * block_rows
    n_pad = rows_pad * r
    if n_pad != n:
        t = jnp.pad(t, (0, n_pad - n))
    t2 = t.reshape(rows_pad, r)                                # free reshape

    # Constant 0/1 expansion matrix: E[i, i*dim_t:(i+1)*dim_t] = 1.
    expand = jnp.repeat(jnp.eye(r, dtype=jnp.float32), dim_t, axis=1)

    freq_t = jnp.tile(basis_freq.astype(jnp.float32), r).reshape(1, lane_width)
    phase_t = jnp.tile(phase.astype(jnp.float32), r).reshape(1, lane_width)

    # Explicit VMEM budget: double-buffered out + t + E + freq/phase, with
    # 2x margin.  >= 32 MiB (raises v5e's 16 MiB default), <= 48 MiB (stays
    # comfortably under v7x's 64 MiB physical per-TC VMEM).
    vmem_need = 2 * 4 * (block_rows * lane_width + block_rows * r
                         + r * lane_width + 2 * lane_width)
    vmem_limit = int(min(max(2 * vmem_need, 32 * 1024 * 1024),
                         48 * 1024 * 1024))

    elems = rows_pad * lane_width
    cost = pl.CostEstimate(
        flops=2 * rows_pad * r * lane_width + 2 * elems,
        transcendentals=elems,
        bytes_accessed=4 * (elems + rows_pad * r + r * lane_width
                            + 2 * lane_width),
    )

    out = pl.pallas_call(
        _time_enc_kernel,
        out_shape=jax.ShapeDtypeStruct((rows_pad, lane_width), jnp.float32),
        grid_spec=pl.GridSpec(
            grid=(rows_pad // block_rows,),
            in_specs=[
                pl.BlockSpec((block_rows, r), lambda i: (i, 0)),       # t
                pl.BlockSpec((r, lane_width), lambda i: (0, 0)),       # E
                pl.BlockSpec((1, lane_width), lambda i: (0, 0)),       # freq
                pl.BlockSpec((1, lane_width), lambda i: (0, 0)),       # phase
            ],
            out_specs=pl.BlockSpec((block_rows, lane_width), lambda i: (i, 0)),
        ),
        compiler_params=pltpu.CompilerParams(
            dimension_semantics=("parallel",),
            vmem_limit_bytes=vmem_limit,
        ),
        cost_estimate=cost,
    )(t2, expand, freq_t, phase_t)

    # (rows_pad, r*dim_t) has identical row-major bytes as (rows_pad*r, dim_t).
    return out.reshape(rows_pad * r, dim_t)[:n]


if __name__ == "__main__":
    # Module hyper-params (small, consistent with TimeEnc.__init__).
    dim_t = 32
    nume = 100

    # Deterministic parameter init (exactly what TimeEnc.__init__ does).
    basis_freq = jnp.asarray(1.0 / 10.0 ** np.linspace(0, 9, dim_t),
                             dtype=jnp.float32)
    phase = jnp.zeros((dim_t,), dtype=jnp.float32)

    # Deterministic example inputs.
    N = 16
    key = jax.random.PRNGKey(0)
    k_nid, k_ts = jax.random.split(key)
    nid = jax.random.randint(k_nid, (N,), minval=0, maxval=10 * nume,
                             dtype=jnp.int32)
    ts = jax.random.uniform(k_ts, (N,), minval=0.0, maxval=1000.0,
                            dtype=jnp.float32)

    out = time_enc(nid, ts, basis_freq, phase, nume)
    out = jax.block_until_ready(out)

    # Pure-JAX reference check (same math as the PyTorch forward).
    t_ref = ts.astype(jnp.float32) - (nid // nume).astype(jnp.float32)
    ref = jnp.cos(t_ref[:, None] * basis_freq[None, :] + phase[None, :])
    np.testing.assert_allclose(np.asarray(out), np.asarray(ref),
                               rtol=1e-5, atol=1e-5)

    assert out.shape == (N, dim_t) and out.dtype == jnp.float32
    print("KERNEL_OK")
</pallas_src>

<mosaic_0001>
module attributes {stable_mosaic.version = 11 : i64} {
  func.func @_time_enc_kernel(%arg0: i32, %arg1: memref<8x32xf32, #tpu.memory_space<vmem>>, %arg2: memref<32x1024xf32, #tpu.memory_space<vmem>>, %arg3: memref<1x1024xf32, #tpu.memory_space<vmem>>, %arg4: memref<1x1024xf32, #tpu.memory_space<vmem>>, %arg5: memref<8x1024xf32, #tpu.memory_space<vmem>>) attributes {dimension_semantics = [#tpu.dimension_semantics<parallel>], iteration_bounds = array<i64: 1>, scalar_prefetch = 0 : i64, scratch_operands = 0 : i64, tpu.core_type = #tpu.core_type<tc>, window_params = [{transform_indices = @transform_0, window_bounds = array<i64: 8, 32>}, {pipeline_mode = #tpu.pipeline_mode<synchronous>, transform_indices = @transform_1, window_bounds = array<i64: 32, 1024>}, {pipeline_mode = #tpu.pipeline_mode<synchronous>, transform_indices = @transform_2, window_bounds = array<i64: 1, 1024>}, {pipeline_mode = #tpu.pipeline_mode<synchronous>, transform_indices = @transform_3, window_bounds = array<i64: 1, 1024>}, {transform_indices = @transform_4, window_bounds = array<i64: 8, 1024>}]} {
    %c0 = arith.constant 0 : index
    %c0_0 = arith.constant 0 : index
    %0 = vector.load %arg1[%c0, %c0_0] : memref<8x32xf32, #tpu.memory_space<vmem>>, vector<8x32xf32>
    %c0_1 = arith.constant 0 : index
    %c0_2 = arith.constant 0 : index
    %1 = vector.load %arg2[%c0_1, %c0_2] : memref<32x1024xf32, #tpu.memory_space<vmem>>, vector<32x1024xf32>
    %cst = arith.constant dense<0.000000e+00> : vector<8x1024xf32>
    %2 = tpu.matmul %0, %1, %cst {dimension_numbers = #tpu.dot_dimension_numbers<[1], [0], [0], [1], [0, 0, 1, 1], [], []>, precision = #tpu.contract_precision<fp32>} : vector<8x32xf32>, vector<32x1024xf32>, vector<8x1024xf32> -> vector<8x1024xf32>
    %c0_3 = arith.constant 0 : index
    %c0_4 = arith.constant 0 : index
    %3 = vector.load %arg3[%c0_3, %c0_4] : memref<1x1024xf32, #tpu.memory_space<vmem>>, vector<1x1024xf32>
    %4 = vector.broadcast %3 : vector<1x1024xf32> to vector<8x1024xf32>
    %5 = arith.mulf %2, %4 : vector<8x1024xf32>
    %c0_5 = arith.constant 0 : index
    %c0_6 = arith.constant 0 : index
    %6 = vector.load %arg4[%c0_5, %c0_6] : memref<1x1024xf32, #tpu.memory_space<vmem>>, vector<1x1024xf32>
    %7 = vector.broadcast %6 : vector<1x1024xf32> to vector<8x1024xf32>
    %8 = arith.addf %5, %7 : vector<8x1024xf32>
    %9 = math.cos %8 : vector<8x1024xf32>
    %c0_7 = arith.constant 0 : index
    %c0_8 = arith.constant 0 : index
    %10 = vector.load %arg5[%c0_7, %c0_8] : memref<8x1024xf32, #tpu.memory_space<vmem>>, vector<8x1024xf32>
    tpu.vector_store %arg5[%c0_7, %c0_8], %9 {strides = array<i32>} : memref<8x1024xf32, #tpu.memory_space<vmem>>, vector<8x1024xf32>,
    return
  }
  func.func @transform_0(%arg0: i32) -> (i32, i32) {
    %c0_i32 = arith.constant 0 : i32
    %c0_i32_0 = arith.constant 0 : i32
    return %arg0, %c0_i32 : i32, i32
  }
  func.func @transform_1(%arg0: i32) -> (i32, i32) {
    %c0_i32 = arith.constant 0 : i32
    %c0_i32_0 = arith.constant 0 : i32
    %c0_i32_1 = arith.constant 0 : i32
    return %c0_i32, %c0_i32_0 : i32, i32
  }
  func.func @transform_2(%arg0: i32) -> (i32, i32) {
    %c0_i32 = arith.constant 0 : i32
    %c0_i32_0 = arith.constant 0 : i32
    %c0_i32_1 = arith.constant 0 : i32
    return %c0_i32, %c0_i32_0 : i32, i32
  }
  func.func @transform_3(%arg0: i32) -> (i32, i32) {
    %c0_i32 = arith.constant 0 : i32
    %c0_i32_0 = arith.constant 0 : i32
    %c0_i32_1 = arith.constant 0 : i32
    return %c0_i32, %c0_i32_0 : i32, i32
  }
  func.func @transform_4(%arg0: i32) -> (i32, i32) {
    %c0_i32 = arith.constant 0 : i32
    %c0_i32_0 = arith.constant 0 : i32
    return %arg0, %c0_i32 : i32, i32
  }
}

</mosaic_0001>

<llo_original>
// kernel: tpu_custom_call.1
$region0: #{tpu_custom_call.1}
  #allocation0 [shape = 'u32[]', space=smem, size = 0x4, offset = 0x4, fixed_abs, tag = 'smem constant byte address 0x4 - core index']
  #allocation1 [shape = 'u32[144,128]{1,0:T(1,128)}', space=vmem, size = 0x12000, scoped, tag = 'internal scratch']
  %s0 = inlined_call_operand.hbm [shape: f32[8,32], index: 0, kind: input, shape index: {}]
  %s1 = inlined_call_operand.hbm [shape: f32[32,1024], index: 1, kind: input, shape index: {}]
  %s2 = inlined_call_operand.hbm [shape: f32[1,1024], index: 2, kind: input, shape index: {}]
  %s3 = inlined_call_operand.vmem [shape: f32[1,1024], index: 3, kind: input, shape index: {}]
  %s4 = inlined_call_operand.hbm [shape: f32[8,1024], index: 4, kind: output, shape index: {}]
  %s5 = sld [smem:[#allocation0]]
  $region38: #{tpu_custom_call.1} parent=0
    _
  %s7 = ssub.s32 1, %s5
  %s8 = scalar_select 0, %s7, %s5
  $region1: #{tpu_custom_call.1} parent=0
    #allocation2 [shape = 'u8[4096]{0}', space=vmem, size = 0x1000, scoped, tag = 'input window, operand 0, single buffered']
    #allocation3 [shape = 's32[1]{0}', space=sflag, size = 0x4, scoped, tag = 'scoped memory for tpu_custom_call.1']
    #allocation4 [shape = 's32[1]{0}', space=sflag, size = 0x4, scoped, tag = 'scoped memory for tpu_custom_call.1']
    #allocation5 [shape = 'u8[131072]{0}', space=vmem, size = 0x20000, scoped, tag = 'input window, operand 1, single buffered']
    #allocation6 [shape = 's32[1]{0}', space=sflag, size = 0x4, scoped, tag = 'scoped memory for tpu_custom_call.1']
    #allocation7 [shape = 'u8[4096]{0}', space=vmem, size = 0x1000, scoped, tag = 'input window, operand 2, single buffered']
    #allocation8 [shape = 'u8[32768]{0}', space=vmem, size = 0x8000, scoped, tag = 'output window, operand 0, single buffered']
    %9 = vsyncpa [#allocation3], 0
    %10 = vsyncpa [#allocation6], 0
    %11 = vsyncpa [#allocation4], 0
    // Predicated region
    $region2: #{tpu_custom_call.1} parent=1 // pred_check
      _
    $region3: #{tpu_custom_call.1} parent=1 // pred_check_branch
      %13 = sbr.rel (0) target = $region5
    $region4: #{tpu_custom_call.1} parent=1 // pred_region
      %s15 = ssub.s32 128, 128
      %16 = vsyncadd [#allocation3], %s15
      %s18 = sshll.u32 [#allocation2], 4
      %s19 = int_to_ptr.vmem [resolvable:$true] %s18
      %21 = dma.hbm_to_vmem [thread:$0]  %s0, 128, %s19, [#allocation3]
    $region5: #{tpu_custom_call.1} parent=1 // pred_fallthru
      _
    // Predicated region
    $region6: #{tpu_custom_call.1} parent=1 // pred_check
      _
    $region7: #{tpu_custom_call.1} parent=1 // pred_check_branch
      %23 = sbr.rel (0) target = $region9
    $region8: #{tpu_custom_call.1} parent=1 // pred_region
      %s25 = ssub.s32 4096, 4096
      %26 = vsyncadd [#allocation6], %s25
      %s27 = sshll.u32 [#allocation5], 4
      %s28 = int_to_ptr.vmem [resolvable:$true] %s27
      %33 = dma.hbm_to_vmem [thread:$0]  %s1, 4096, %s28, [#allocation6], 1024, 1024, 64
    $region9: #{tpu_custom_call.1} parent=1 // pred_fallthru
      _
    // Predicated region
    $region10: #{tpu_custom_call.1} parent=1 // pred_check
      _
    $region11: #{tpu_custom_call.1} parent=1 // pred_check_branch
      %35 = sbr.rel (0) target = $region13
    $region12: #{tpu_custom_call.1} parent=1 // pred_region
      %s37 = ssub.s32 128, 128
      %38 = vsyncadd [#allocation6], %s37
      %s40 = sshll.u32 [#allocation7], 4
      %s41 = int_to_ptr.vmem [resolvable:$true] %s40
      %43 = dma.hbm_to_vmem [thread:$0]  %s2, 128, %s41, [#allocation6]
    $region13: #{tpu_custom_call.1} parent=1 // pred_fallthru
      _
    // Predicated region
    $region14: #{tpu_custom_call.1} parent=1 // pred_check
      _
    $region15: #{tpu_custom_call.1} parent=1 // pred_check_branch
      %45 = sbr.rel (0) target = $region17
    $region16: #{tpu_custom_call.1} parent=1 // pred_region
      _
    $region17: #{tpu_custom_call.1} parent=1 // pred_fallthru
      _
    // Predicated region
    $region18: #{tpu_custom_call.1} parent=1 // pred_check
      _
    $region19: #{tpu_custom_call.1} parent=1 // pred_check_branch
      %47 = sbr.rel (0) target = $region21
    $region20: #{tpu_custom_call.1} parent=1 // pred_region
      %48 = dma.done [#allocation3], 128
    $region21: #{tpu_custom_call.1} parent=1 // pred_fallthru
      _
    // Predicated region
    $region22: #{tpu_custom_call.1} parent=1 // pred_check
      _
    $region23: #{tpu_custom_call.1} parent=1 // pred_check_branch
      %50 = sbr.rel (0) target = $region25
    $region24: #{tpu_custom_call.1} parent=1 // pred_region
      %51 = dma.done [#allocation6], 4096
    $region25: #{tpu_custom_call.1} parent=1 // pred_fallthru
      _
    // Predicated region
    $region26: #{tpu_custom_call.1} parent=1 // pred_check
      _
    $region27: #{tpu_custom_call.1} parent=1 // pred_check_branch
      %53 = sbr.rel (0) target = $region29
    $region28: #{tpu_custom_call.1} parent=1 // pred_region
      %54 = dma.done [#allocation6], 128
    $region29: #{tpu_custom_call.1} parent=1 // pred_fallthru
      _
    %v55 = vld [vmem:[#allocation2] sm:$0xff]
    %v56 = vld [vmem:[#allocation5] sm:$0xff]
    %v57 = vld [vmem:[#allocation5 + $0x8] sm:$0xff]
    %v58 = vld [vmem:[#allocation5 + $0x10] sm:$0xff]
    %v59 = vld [vmem:[#allocation5 + $0x18] sm:$0xff]
    %v60 = vld [vmem:[#allocation5 + $0x20] sm:$0xff]
    %v61 = vld [vmem:[#allocation5 + $0x28] sm:$0xff]
    %v62 = vld [vmem:[#allocation5 + $0x30] sm:$0xff]
    %v63 = vld [vmem:[#allocation5 + $0x38] sm:$0xff]
    %v64 = vld [vmem:[#allocation5 + $0x40] sm:$0xff]
    %v65 = vld [vmem:[#allocation5 + $0x48] sm:$0xff]
    %v66 = vld [vmem:[#allocation5 + $0x50] sm:$0xff]
    %v67 = vld [vmem:[#allocation5 + $0x58] sm:$0xff]
    %v68 = vld [vmem:[#allocation5 + $0x60] sm:$0xff]
    %v69 = vld [vmem:[#allocation5 + $0x68] sm:$0xff]
    %v70 = vld [vmem:[#allocation5 + $0x70] sm:$0xff]
    %v71 = vld [vmem:[#allocation5 + $0x78] sm:$0xff]
    %v72 = vld [vmem:[#allocation5 + $0x80] sm:$0xff]
    %v73 = vld [vmem:[#allocation5 + $0x88] sm:$0xff]
    %v74 = vld [vmem:[#allocation5 + $0x90] sm:$0xff]
    %v75 = vld [vmem:[#allocation5 + $0x98] sm:$0xff]
    %v76 = vld [vmem:[#allocation5 + $0xa0] sm:$0xff]
    %v77 = vld [vmem:[#allocation5 + $0xa8] sm:$0xff]
    %v78 = vld [vmem:[#allocation5 + $0xb0] sm:$0xff]
    %v79 = vld [vmem:[#allocation5 + $0xb8] sm:$0xff]
    %v80 = vld [vmem:[#allocation5 + $0xc0] sm:$0xff]
    %v81 = vld [vmem:[#allocation5 + $0xc8] sm:$0xff]
    %v82 = vld [vmem:[#allocation5 + $0xd0] sm:$0xff]
    %v83 = vld [vmem:[#allocation5 + $0xd8] sm:$0xff]
    %v84 = vld [vmem:[#allocation5 + $0xe0] sm:$0xff]
    %v85 = vld [vmem:[#allocation5 + $0xe8] sm:$0xff]
    %v86 = vld [vmem:[#allocation5 + $0xf0] sm:$0xff]
    %v87 = vld [vmem:[#allocation5 + $0xf8] sm:$0xff]
    %vm88 = vcmask 261120
    %v90 = vsel %vm88, %v55, 0
    %v92 = vand.u32 %v57, 4294901760
    %93 = vmatprep.subr.mxu0 %v92
    %v94 = vand.u32 %v56, 4294901760
    %95 = vmatpush1.msra.mxu0 %v94
    %v96 = vand.u32 %v65, 4294901760
    %97 = vmatprep.subr.mxu0 %v96
    %v98 = vand.u32 %v64, 4294901760
    %99 = vmatpush1.msra.mxu0 %v98
    %v100 = vand.u32 %v73, 4294901760
    %101 = vmatprep.subr.mxu0 %v100
    %v102 = vand.u32 %v72, 4294901760
    %103 = vmatpush1.msra.mxu0 %v102
    %v104 = vand.u32 %v81, 4294901760
    %105 = vmatprep.subr.mxu0 %v104
    %v106 = vand.u32 %v80, 4294901760
    %107 = vmatpush1.msra.mxu0 %v106
    %108 = vmatprep.subr.mxu0 0.0
    %109 = vmatpush1.msra.mxu0 0.0
    %110 = vmatprep.subr.mxu0 0.0
    %111 = vmatpush1.msra.mxu0 0.0
    %112 = vmatprep.subr.mxu0 0.0
    %113 = vmatpush1.msra.mxu0 0.0
    %114 = vmatprep.subr.mxu0 0.0
    %115 = vmatpush1.msra.mxu0 0.0
    %116 = vmatprep.subr.mxu0 0.0
    %117 = vmatpush1.msra.mxu0 0.0
    %118 = vmatprep.subr.mxu0 0.0
    %119 = vmatpush1.msra.mxu0 0.0
    %120 = vmatprep.subr.mxu0 0.0
    %121 = vmatpush1.msra.mxu0 0.0
    %122 = vmatprep.subr.mxu0 0.0
    %123 = vmatpush1.msra.mxu0 0.0
    %124 = vmatprep.subr.mxu0 0.0
    %125 = vmatpush1.msra.mxu0 0.0
    %126 = vmatprep.subr.mxu0 0.0
    %127 = vmatpush1.msra.mxu0 0.0
    %128 = vmatprep.subr.mxu0 0.0
    %129 = vmatpush1.msra.mxu0 0.0
    %130 = vmatprep.subr.mxu0 0.0
    %131 = vmatpush1.msra.mxu0 0.0
    %132 = vmatprep.subr.mxu0 0.0
    %133 = vmatpush1.msra.mxu0 0.0
    %134 = vmatprep.subr.mxu0 0.0
    %135 = vmatpush1.msra.mxu0 0.0
    %136 = vmatprep.subr.mxu0 0.0
    %137 = vmatpush1.msra.mxu0 0.0
    %138 = vmatprep.subr.mxu0 0.0
    %139 = vmatpush1.msra.mxu0 0.0
    %140 = vmatprep.subr.mxu0 0.0
    %141 = vmatpush1.msra.mxu0 0.0
    %142 = vmatprep.subr.mxu0 0.0
    %143 = vmatpush1.msra.mxu0 0.0
    %144 = vmatprep.subr.mxu0 0.0
    %145 = vmatpush1.msra.mxu0 0.0
    %146 = vmatprep.subr.mxu0 0.0
    %147 = vmatpush1.msra.mxu0 0.0
    %148 = vmatprep.subr.mxu0 0.0
    %149 = vmatpush1.msra.mxu0 0.0
    %150 = vmatprep.subr.mxu0 0.0
    %151 = vmatpush1.msra.mxu0 0.0
    %152 = vmatprep.subr.mxu0 0.0
    %153 = vmatpush1.msra.mxu0 0.0
    %154 = vmatprep.subr.mxu0 0.0
    %155 = vmatpush1.msra.mxu0 0.0
    %156 = vmatprep.subr.mxu0 0.0
    %157 = vmatpush1.msra.mxu0 0.0
    %158 = vmatprep.subr.mxu0 0.0
    %159 = vmatpush1.msra.mxu0 0.0
    %160 = vmatprep.subr.mxu0 0.0
    %161 = vmatpush1.msra.mxu0 0.0
    %162 = vmatprep.subr.mxu0 0.0
    %163 = vmatpush1.msra.mxu0 0.0
    %164 = vmatprep.mubr.f32.mxu0 0.0
    %v165 = vand.u32 %v90, 4294901760
    %v166 = vsub.f32 %v90, %v165
    %v167 = vand.u32 %v166, 4294901760
    %v168 = vsub.f32 %v166, %v167
    %v169 = vand.u32 %v168, 4294901760
    %170 = vmatmul.mubr.f32.gmra.mrb[0].mxu0 %v169
    %v171 = vpop.f32.mrb[0].mxu0
    %v172 = vadd.f32 0.0, %v171
    %v173 = vpop.f32.mrb[0].mxu0
    %v174 = vadd.f32 0.0, %v173
    %175 = vdwg.mxu0
    %v176 = vand.u32 %v57, 4294901760
    %v177 = vsub.f32 %v57, %v176
    %v178 = vand.u32 %v177, 4294901760
    %v179 = vsub.f32 %v177, %v178
    %v180 = vand.u32 %v179, 4294901760
    %181 = vmatprep.subr.mxu0 %v180
    %v182 = vand.u32 %v56, 4294901760
    %v183 = vsub.f32 %v56, %v182
    %v184 = vand.u32 %v183, 4294901760
    %v185 = vsub.f32 %v183, %v184
    %v186 = vand.u32 %v185, 4294901760
    %187 = vmatpush1.msra.mxu0 %v186
    %v188 = vand.u32 %v65, 4294901760
    %v189 = vsub.f32 %v65, %v188
    %v190 = vand.u32 %v189, 4294901760
    %v191 = vsub.f32 %v189, %v190
    %v192 = vand.u32 %v191, 4294901760
    %193 = vmatprep.subr.mxu0 %v192
    %v194 = vand.u32 %v64, 4294901760
    %v195 = vsub.f32 %v64, %v194
    %v196 = vand.u32 %v195, 4294901760
    %v197 = vsub.f32 %v195, %v196
    %v198 = vand.u32 %v197, 4294901760
    %199 = vmatpush1.msra.mxu0 %v198
    %v200 = vand.u32 %v73, 4294901760
    %v201 = vsub.f32 %v73, %v200
    %v202 = vand.u32 %v201, 4294901760
    %v203 = vsub.f32 %v201, %v202
    %v204 = vand.u32 %v203, 4294901760
    %205 = vmatprep.subr.mxu0 %v204
    %v206 = vand.u32 %v72, 4294901760
    %v207 = vsub.f32 %v72, %v206
    %v208 = vand.u32 %v207, 4294901760
    %v209 = vsub.f32 %v207, %v208
    %v210 = vand.u32 %v209, 4294901760
    %211 = vmatpush1.msra.mxu0 %v210
    %v212 = vand.u32 %v81, 4294901760
    %v213 = vsub.f32 %v81, %v212
    %v214 = vand.u32 %v213, 4294901760
    %v215 = vsub.f32 %v213, %v214
    %v216 = vand.u32 %v215, 4294901760
    %217 = vmatprep.subr.mxu0 %v216
    %v218 = vand.u32 %v80, 4294901760
    %v219 = vsub.f32 %v80, %v218
    %v220 = vand.u32 %v219, 4294901760
    %v221 = vsub.f32 %v219, %v220
    %v222 = vand.u32 %v221, 4294901760
    %223 = vmatpush1.msra.mxu0 %v222
    %224 = vmatprep.subr.mxu0 0.0
    %225 = vmatpush1.msra.mxu0 0.0
    %226 = vmatprep.subr.mxu0 0.0
    %227 = vmatpush1.msra.mxu0 0.0
    %228 = vmatprep.subr.mxu0 0.0
    %229 = vmatpush1.msra.mxu0 0.0
    %230 = vmatprep.subr.mxu0 0.0
    %231 = vmatpush1.msra.mxu0 0.0
    %232 = vmatprep.subr.mxu0 0.0
    %233 = vmatpush1.msra.mxu0 0.0
    %234 = vmatprep.subr.mxu0 0.0
    %235 = vmatpush1.msra.mxu0 0.0
    %236 = vmatprep.subr.mxu0 0.0
    %237 = vmatpush1.msra.mxu0 0.0
    %238 = vmatprep.subr.mxu0 0.0
    %239 = vmatpush1.msra.mxu0 0.0
    %240 = vmatprep.subr.mxu0 0.0
    %241 = vmatpush1.msra.mxu0 0.0
    %242 = vmatprep.subr.mxu0 0.0
    %243 = vmatpush1.msra.mxu0 0.0
    %244 = vmatprep.subr.mxu0 0.0
    %245 = vmatpush1.msra.mxu0 0.0
    %246 = vmatprep.subr.mxu0 0.0
    %247 = vmatpush1.msra.mxu0 0.0
    %248 = vmatprep.subr.mxu0 0.0
    %249 = vmatpush1.msra.mxu0 0.0
    %250 = vmatprep.subr.mxu0 0.0
    %251 = vmatpush1.msra.mxu0 0.0
    %252 = vmatprep.subr.mxu0 0.0
    %253 = vmatpush1.msra.mxu0 0.0
    %254 = vmatprep.subr.mxu0 0.0
    %255 = vmatpush1.msra.mxu0 0.0
    %256 = vmatprep.subr.mxu0 0.0
    %257 = vmatpush1.msra.mxu0 0.0
    %258 = vmatprep.subr.mxu0 0.0
    %259 = vmatpush1.msra.mxu0 0.0
    %260 = vmatprep.subr.mxu0 0.0
    %261 = vmatpush1.msra.mxu0 0.0
    %262 = vmatprep.subr.mxu0 0.0
    %263 = vmatpush1.msra.mxu0 0.0
    %264 = vmatprep.subr.mxu0 0.0
    %265 = vmatpush1.msra.mxu0 0.0
    %266 = vmatprep.subr.mxu0 0.0
    %267 = vmatpush1.msra.mxu0 0.0
    %268 = vmatprep.subr.mxu0 0.0
    %269 = vmatpush1.msra.mxu0 0.0
    %270 = vmatprep.subr.mxu0 0.0
    %271 = vmatpush1.msra.mxu0 0.0
    %272 = vmatprep.subr.mxu0 0.0
    %273 = vmatpush1.msra.mxu0 0.0
    %274 = vmatprep.subr.mxu0 0.0
    %275 = vmatpush1.msra.mxu0 0.0
    %276 = vmatprep.subr.mxu0 0.0
    %277 = vmatpush1.msra.mxu0 0.0
    %278 = vmatprep.subr.mxu0 0.0
    %279 = vmatpush1.msra.mxu0 0.0
    %280 = vmatprep.mubr.f32.mxu0 0.0
    %v281 = vand.u32 %v90, 4294901760
    %282 = vmatmul.mubr.f32.gmra.mrb[0].mxu0 %v281
    %v283 = vpop.f32.mrb[0].mxu0
    %v284 = vadd.f32 %v172, %v283
    %v285 = vpop.f32.mrb[0].mxu0
    %v286 = vadd.f32 %v174, %v285
    %287 = vdwg.mxu0
    %v288 = vand.u32 %v57, 4294901760
    %v289 = vsub.f32 %v57, %v288
    %290 = vmatprep.subr.mxu0 %v289
    %v291 = vand.u32 %v56, 4294901760
    %v292 = vsub.f32 %v56, %v291
    %293 = vmatpush1.msra.mxu0 %v292
    %v294 = vand.u32 %v65, 4294901760
    %v295 = vsub.f32 %v65, %v294
    %296 = vmatprep.subr.mxu0 %v295
    %v297 = vand.u32 %v64, 4294901760
    %v298 = vsub.f32 %v64, %v297
    %299 = vmatpush1.msra.mxu0 %v298
    %v300 = vand.u32 %v73, 4294901760
    %v301 = vsub.f32 %v73, %v300
    %302 = vmatprep.subr.mxu0 %v301
    %v303 = vand.u32 %v72, 4294901760
    %v304 = vsub.f32 %v72, %v303
    %305 = vmatpush1.msra.mxu0 %v304
    %v306 = vand.u32 %v81, 4294901760
    %v307 = vsub.f32 %v81, %v306
    %308 = vmatprep.subr.mxu0 %v307
    %v309 = vand.u32 %v80, 4294901760
    %v310 = vsub.f32 %v80, %v309
    %311 = vmatpush1.msra.mxu0 %v310
    %312 = vmatprep.subr.mxu0 0.0
    %313 = vmatpush1.msra.mxu0 0.0
    %314 = vmatprep.subr.mxu0 0.0
    %315 = vmatpush1.msra.mxu0 0.0
    %316 = vmatprep.subr.mxu0 0.0
    %317 = vmatpush1.msra.mxu0 0.0
    %318 = vmatprep.subr.mxu0 0.0
    %319 = vmatpush1.msra.mxu0 0.0
    %320 = vmatprep.subr.mxu0 0.0
    %321 = vmatpush1.msra.mxu0 0.0
    %322 = vmatprep.subr.mxu0 0.0
    %323 = vmatpush1.msra.mxu0 0.0
    %324 = vmatprep.subr.mxu0 0.0
    %325 = vmatpush1.msra.mxu0 0.0
    %326 = vmatprep.subr.mxu0 0.0
    %327 = vmatpush1.msra.mxu0 0.0
    %328 = vmatprep.subr.mxu0 0.0
    %329 = vmatpush1.msra.mxu0 0.0
    %330 = vmatprep.subr.mxu0 0.0
    %331 = vmatpush1.msra.mxu0 0.0
    %332 = vmatprep.subr.mxu0 0.0
    %333 = vmatpush1.msra.mxu0 0.0
    %334 = vmatprep.subr.mxu0 0.0
    %335 = vmatpush1.msra.mxu0 0.0
    %336 = vmatprep.subr.mxu0 0.0
    %337 = vmatpush1.msra.mxu0 0.0
    %338 = vmatprep.subr.mxu0 0.0
    %339 = vmatpush1.msra.mxu0 0.0
    %340 = vmatprep.subr.mxu0 0.0
    %341 = vmatpush1.msra.mxu0 0.0
    %342 = vmatprep.subr.mxu0 0.0
    %343 = vmatpush1.msra.mxu0 0.0
    %344 = vmatprep.subr.mxu0 0.0
    %345 = vmatpush1.msra.mxu0 0.0
    %346 = vmatprep.subr.mxu0 0.0
    %347 = vmatpush1.msra.mxu0 0.0
    %348 = vmatprep.subr.mxu0 0.0
    %349 = vmatpush1.msra.mxu0 0.0
    %350 = vmatprep.subr.mxu0 0.0
    %351 = vmatpush1.msra.mxu0 0.0
    %352 = vmatprep.subr.mxu0 0.0
    %353 = vmatpush1.msra.mxu0 0.0
    %354 = vmatprep.subr.mxu0 0.0
    %355 = vmatpush1.msra.mxu0 0.0
    %356 = vmatprep.subr.mxu0 0.0
    %357 = vmatpush1.msra.mxu0 0.0
    %358 = vmatprep.subr.mxu0 0.0
    %359 = vmatpush1.msra.mxu0 0.0
    %360 = vmatprep.subr.mxu0 0.0
    %361 = vmatpush1.msra.mxu0 0.0
    %362 = vmatprep.subr.mxu0 0.0
    %363 = vmatpush1.msra.mxu0 0.0
    %364 = vmatprep.subr.mxu0 0.0
    %365 = vmatpush1.msra.mxu0 0.0
    %366 = vmatprep.subr.mxu0 0.0
    %367 = vmatpush1.msra.mxu0 0.0
    %368 = vmatprep.mubr.f32.mxu0 0.0
    %v369 = vand.u32 %v90, 4294901760
    %v370 = vsub.f32 %v90, %v369
    %371 = vmatmul.mubr.f32.gmra.mrb[0].mxu0 %v370
    %v372 = vpop.f32.mrb[0].mxu0
    %v373 = vadd.f32 %v284, %v372
    %v374 = vpop.f32.mrb[0].mxu0
    %v375 = vadd.f32 %v286, %v374
    %376 = vdwg.mxu0
    %v377 = vand.u32 %v57, 4294901760
    %378 = vmatprep.subr.mxu0 %v377
    %v379 = vand.u32 %v56, 4294901760
    %380 = vmatpush1.msra.mxu0 %v379
    %v381 = vand.u32 %v65, 4294901760
    %382 = vmatprep.subr.mxu0 %v381
    %v383 = vand.u32 %v64, 4294901760
    %384 = vmatpush1.msra.mxu0 %v383
    %v385 = vand.u32 %v73, 4294901760
    %386 = vmatprep.subr.mxu0 %v385
    %v387 = vand.u32 %v72, 4294901760
    %388 = vmatpush1.msra.mxu0 %v387
    %v389 = vand.u32 %v81, 4294901760
    %390 = vmatprep.subr.mxu0 %v389
    %v391 = vand.u32 %v80, 4294901760
    %392 = vmatpush1.msra.mxu0 %v391
    %393 = vmatprep.subr.mxu0 0.0
    %394 = vmatpush1.msra.mxu0 0.0
    %395 = vmatprep.subr.mxu0 0.0
    %396 = vmatpush1.msra.mxu0 0.0
    %397 = vmatprep.subr.mxu0 0.0
    %398 = vmatpush1.msra.mxu0 0.0
    %399 = vmatprep.subr.mxu0 0.0
    %400 = vmatpush1.msra.mxu0 0.0
    %401 = vmatprep.subr.mxu0 0.0
    %402 = vmatpush1.msra.mxu0 0.0
    %403 = vmatprep.subr.mxu0 0.0
    %404 = vmatpush1.msra.mxu0 0.0
    %405 = vmatprep.subr.mxu0 0.0
    %406 = vmatpush1.msra.mxu0 0.0
    %407 = vmatprep.subr.mxu0 0.0
    %408 = vmatpush1.msra.mxu0 0.0
    %409 = vmatprep.subr.mxu0 0.0
    %410 = vmatpush1.msra.mxu0 0.0
    %411 = vmatprep.subr.mxu0 0.0
    %412 = vmatpush1.msra.mxu0 0.0
    %413 = vmatprep.subr.mxu0 0.0
    %414 = vmatpush1.msra.mxu0 0.0
    %415 = vmatprep.subr.mxu0 0.0
    %416 = vmatpush1.msra.mxu0 0.0
    %417 = vmatprep.subr.mxu0 0.0
    %418 = vmatpush1.msra.mxu0 0.0
    %419 = vmatprep.subr.mxu0 0.0
    %420 = vmatpush1.msra.mxu0 0.0
    %421 = vmatprep.subr.mxu0 0.0
    %422 = vmatpush1.msra.mxu0 0.0
    %423 = vmatprep.subr.mxu0 0.0
    %424 = vmatpush1.msra.mxu0 0.0
    %425 = vmatprep.subr.mxu0 0.0
    %426 = vmatpush1.msra.mxu0 0.0
    %427 = vmatprep.subr.mxu0 0.0
    %428 = vmatpush1.msra.mxu0 0.0
    %429 = vmatprep.subr.mxu0 0.0
    %430 = vmatpush1.msra.mxu0 0.0
    %431 = vmatprep.subr.mxu0 0.0
    %432 = vmatpush1.msra.mxu0 0.0
    %433 = vmatprep.subr.mxu0 0.0
    %434 = vmatpush1.msra.mxu0 0.0
    %435 = vmatprep.subr.mxu0 0.0
    %436 = vmatpush1.msra.mxu0 0.0
    %437 = vmatprep.subr.mxu0 0.0
    %438 = vmatpush1.msra.mxu0 0.0
    %439 = vmatprep.subr.mxu0 0.0
    %440 = vmatpush1.msra.mxu0 0.0
    %441 = vmatprep.subr.mxu0 0.0
    %442 = vmatpush1.msra.mxu0 0.0
    %443 = vmatprep.subr.mxu0 0.0
    %444 = vmatpush1.msra.mxu0 0.0
    %445 = vmatprep.subr.mxu0 0.0
    %446 = vmatpush1.msra.mxu0 0.0
    %447 = vmatprep.subr.mxu0 0.0
    %448 = vmatpush1.msra.mxu0 0.0
    %449 = vmatprep.mubr.f32.mxu0 0.0
    %v450 = vand.u32 %v90, 4294901760
    %v451 = vsub.f32 %v90, %v450
    %v452 = vand.u32 %v451, 4294901760
    %453 = vmatmul.mubr.f32.gmra.mrb[0].mxu0 %v452
    %v454 = vpop.f32.mrb[0].mxu0
    %v455 = vadd.f32 %v373, %v454
    %v456 = vpop.f32.mrb[0].mxu0
    %v457 = vadd.f32 %v375, %v456
    %458 = vdwg.mxu0
    %v459 = vand.u32 %v57, 4294901760
    %v460 = vsub.f32 %v57, %v459
    %v461 = vand.u32 %v460, 4294901760
    %462 = vmatprep.subr.mxu0 %v461
    %v463 = vand.u32 %v56, 4294901760
    %v464 = vsub.f32 %v56, %v463
    %v465 = vand.u32 %v464, 4294901760
    %466 = vmatpush1.msra.mxu0 %v465
    %v467 = vand.u32 %v65, 4294901760
    %v468 = vsub.f32 %v65, %v467
    %v469 = vand.u32 %v468, 4294901760
    %470 = vmatprep.subr.mxu0 %v469
    %v471 = vand.u32 %v64, 4294901760
    %v472 = vsub.f32 %v64, %v471
    %v473 = vand.u32 %v472, 4294901760
    %474 = vmatpush1.msra.mxu0 %v473
    %v475 = vand.u32 %v73, 4294901760
    %v476 = vsub.f32 %v73, %v475
    %v477 = vand.u32 %v476, 4294901760
    %478 = vmatprep.subr.mxu0 %v477
    %v479 = vand.u32 %v72, 4294901760
    %v480 = vsub.f32 %v72, %v479
    %v481 = vand.u32 %v480, 4294901760
    %482 = vmatpush1.msra.mxu0 %v481
    %v483 = vand.u32 %v81, 4294901760
    %v484 = vsub.f32 %v81, %v483
    %v485 = vand.u32 %v484, 4294901760
    %486 = vmatprep.subr.mxu0 %v485
    %v487 = vand.u32 %v80, 4294901760
    %v488 = vsub.f32 %v80, %v487
    %v489 = vand.u32 %v488, 4294901760
    %490 = vmatpush1.msra.mxu0 %v489
    %491 = vmatprep.subr.mxu0 0.0
    %492 = vmatpush1.msra.mxu0 0.0
    %493 = vmatprep.subr.mxu0 0.0
    %494 = vmatpush1.msra.mxu0 0.0
    %495 = vmatprep.subr.mxu0 0.0
    %496 = vmatpush1.msra.mxu0 0.0
    %497 = vmatprep.subr.mxu0 0.0
    %498 = vmatpush1.msra.mxu0 0.0
    %499 = vmatprep.subr.mxu0 0.0
    %500 = vmatpush1.msra.mxu0 0.0
    %501 = vmatprep.subr.mxu0 0.0
    %502 = vmatpush1.msra.mxu0 0.0
    %503 = vmatprep.subr.mxu0 0.0
    %504 = vmatpush1.msra.mxu0 0.0
    %505 = vmatprep.subr.mxu0 0.0
    %506 = vmatpush1.msra.mxu0 0.0
    %507 = vmatprep.subr.mxu0 0.0
    %508 = vmatpush1.msra.mxu0 0.0
    %509 = vmatprep.subr.mxu0 0.0
    %510 = vmatpush1.msra.mxu0 0.0
    %511 = vmatprep.subr.mxu0 0.0
    %512 = vmatpush1.msra.mxu0 0.0
    %513 = vmatprep.subr.mxu0 0.0
    %514 = vmatpush1.msra.mxu0 0.0
    %515 = vmatprep.subr.mxu0 0.0
    %516 = vmatpush1.msra.mxu0 0.0
    %517 = vmatprep.subr.mxu0 0.0
    %518 = vmatpush1.msra.mxu0 0.0
    %519 = vmatprep.subr.mxu0 0.0
    %520 = vmatpush1.msra.mxu0 0.0
    %521 = vmatprep.subr.mxu0 0.0
    %522 = vmatpush1.msra.mxu0 0.0
    %523 = vmatprep.subr.mxu0 0.0
    %524 = vmatpush1.msra.mxu0 0.0
    %525 = vmatprep.subr.mxu0 0.0
    %526 = vmatpush1.msra.mxu0 0.0
    %527 = vmatprep.subr.mxu0 0.0
    %528 = vmatpush1.msra.mxu0 0.0
    %529 = vmatprep.subr.mxu0 0.0
    %530 = vmatpush1.msra.mxu0 0.0
    %531 = vmatprep.subr.mxu0 0.0
    %532 = vmatpush1.msra.mxu0 0.0
    %533 = vmatprep.subr.mxu0 0.0
    %534 = vmatpush1.msra.mxu0 0.0
    %535 = vmatprep.subr.mxu0 0.0
    %536 = vmatpush1.msra.mxu0 0.0
    %537 = vmatprep.subr.mxu0 0.0
    %538 = vmatpush1.msra.mxu0 0.0
    %539 = vmatprep.subr.mxu0 0.0
    %540 = vmatpush1.msra.mxu0 0.0
    %541 = vmatprep.subr.mxu0 0.0
    %542 = vmatpush1.msra.mxu0 0.0
    %543 = vmatprep.subr.mxu0 0.0
    %544 = vmatpush1.msra.mxu0 0.0
    %545 = vmatprep.subr.mxu0 0.0
    %546 = vmatpush1.msra.mxu0 0.0
    %547 = vmatprep.mubr.f32.mxu0 0.0
    %v548 = vand.u32 %v90, 4294901760
    %549 = vmatmul.mubr.f32.gmra.mrb[0].mxu0 %v548
    %v550 = vpop.f32.mrb[0].mxu0
    %v551 = vadd.f32 %v455, %v550
    %v552 = vpop.f32.mrb[0].mxu0
    %v553 = vadd.f32 %v457, %v552
    %554 = vdwg.mxu0
    %v555 = vand.u32 %v57, 4294901760
    %556 = vmatprep.subr.mxu0 %v555
    %v557 = vand.u32 %v56, 4294901760
    %558 = vmatpush1.msra.mxu0 %v557
    %v559 = vand.u32 %v65, 4294901760
    %560 = vmatprep.subr.mxu0 %v559
    %v561 = vand.u32 %v64, 4294901760
    %562 = vmatpush1.msra.mxu0 %v561
    %v563 = vand.u32 %v73, 4294901760
    %564 = vmatprep.subr.mxu0 %v563
    %v565 = vand.u32 %v72, 4294901760
    %566 = vmatpush1.msra.mxu0 %v565
    %v567 = vand.u32 %v81, 4294901760
    %568 = vmatprep.subr.mxu0 %v567
    %v569 = vand.u32 %v80, 4294901760
    %570 = vmatpush1.msra.mxu0 %v569
    %571 = vmatprep.subr.mxu0 0.0
    %572 = vmatpush1.msra.mxu0 0.0
    %573 = vmatprep.subr.mxu0 0.0
    %574 = vmatpush1.msra.mxu0 0.0
    %575 = vmatprep.subr.mxu0 0.0
    %576 = vmatpush1.msra.mxu0 0.0
    %577 = vmatprep.subr.mxu0 0.0
    %578 = vmatpush1.msra.mxu0 0.0
    %579 = vmatprep.subr.mxu0 0.0
    %580 = vmatpush1.msra.mxu0 0.0
    %581 = vmatprep.subr.mxu0 0.0
    %582 = vmatpush1.msra.mxu0 0.0
    %583 = vmatprep.subr.mxu0 0.0
    %584 = vmatpush1.msra.mxu0 0.0
    %585 = vmatprep.subr.mxu0 0.0
    %586 = vmatpush1.msra.mxu0 0.0
    %587 = vmatprep.subr.mxu0 0.0
    %588 = vmatpush1.msra.mxu0 0.0
    %589 = vmatprep.subr.mxu0 0.0
    %590 = vmatpush1.msra.mxu0 0.0
    %591 = vmatprep.subr.mxu0 0.0
    %592 = vmatpush1.msra.mxu0 0.0
    %593 = vmatprep.subr.mxu0 0.0
    %594 = vmatpush1.msra.mxu0 0.0
    %595 = vmatprep.subr.mxu0 0.0
    %596 = vmatpush1.msra.mxu0 0.0
    %597 = vmatprep.subr.mxu0 0.0
    %598 = vmatpush1.msra.mxu0 0.0
    %599 = vmatprep.subr.mxu0 0.0
    %600 = vmatpush1.msra.mxu0 0.0
    %601 = vmatprep.subr.mxu0 0.0
    %602 = vmatpush1.msra.mxu0 0.0
    %603 = vmatprep.subr.mxu0 0.0
    %604 = vmatpush1.msra.mxu0 0.0
    %605 = vmatprep.subr.mxu0 0.0
    %606 = vmatpush1.msra.mxu0 0.0
    %607 = vmatprep.subr.mxu0 0.0
    %608 = vmatpush1.msra.mxu0 0.0
    %609 = vmatprep.subr.mxu0 0.0
    %610 = vmatpush1.msra.mxu0 0.0
    %611 = vmatprep.subr.mxu0 0.0
    %612 = vmatpush1.msra.mxu0 0.0
    %613 = vmatprep.subr.mxu0 0.0
    %614 = vmatpush1.msra.mxu0 0.0
    %615 = vmatprep.subr.mxu0 0.0
    %616 = vmatpush1.msra.mxu0 0.0
    %617 = vmatprep.subr.mxu0 0.0
    %618 = vmatpush1.msra.mxu0 0.0
    %619 = vmatprep.subr.mxu0 0.0
    %620 = vmatpush1.msra.mxu0 0.0
    %621 = vmatprep.subr.mxu0 0.0
    %622 = vmatpush1.msra.mxu0 0.0
    %623 = vmatprep.subr.mxu0 0.0
    %624 = vmatpush1.msra.mxu0 0.0
    %625 = vmatprep.subr.mxu0 0.0
    %626 = vmatpush1.msra.mxu0 0.0
    %627 = vmatprep.mubr.f32.mxu0 0.0
    %v628 = vand.u32 %v90, 4294901760
    %629 = vmatmul.mubr.f32.gmra.mrb[0].mxu0 %v628
    %v630 = vpop.f32.mrb[0].mxu0
    %v631 = vadd.f32 %v551, %v630
    %v632 = vpop.f32.mrb[0].mxu0
    %v633 = vadd.f32 %v553, %v632
    %634 = vdwg.mxu0
    %v635 = vand.u32 %v59, 4294901760
    %636 = vmatprep.subr.mxu0 %v635
    %v637 = vand.u32 %v58, 4294901760
    %638 = vmatpush1.msra.mxu0 %v637
    %v639 = vand.u32 %v67, 4294901760
    %640 = vmatprep.subr.mxu0 %v639
    %v641 = vand.u32 %v66, 4294901760
    %642 = vmatpush1.msra.mxu0 %v641
    %v643 = vand.u32 %v75, 4294901760
    %644 = vmatprep.subr.mxu0 %v643
    %v645 = vand.u32 %v74, 4294901760
    %646 = vmatpush1.msra.mxu0 %v645
    %v647 = vand.u32 %v83, 4294901760
    %648 = vmatprep.subr.mxu0 %v647
    %v649 = vand.u32 %v82, 4294901760
    %650 = vmatpush1.msra.mxu0 %v649
    %651 = vmatprep.subr.mxu0 0.0
    %652 = vmatpush1.msra.mxu0 0.0
    %653 = vmatprep.subr.mxu0 0.0
    %654 = vmatpush1.msra.mxu0 0.0
    %655 = vmatprep.subr.mxu0 0.0
    %656 = vmatpush1.msra.mxu0 0.0
    %657 = vmatprep.subr.mxu0 0.0
    %658 = vmatpush1.msra.mxu0 0.0
    %659 = vmatprep.subr.mxu0 0.0
    %660 = vmatpush1.msra.mxu0 0.0
    %661 = vmatprep.subr.mxu0 0.0
    %662 = vmatpush1.msra.mxu0 0.0
    %663 = vmatprep.subr.mxu0 0.0
    %664 = vmatpush1.msra.mxu0 0.0
    %665 = vmatprep.subr.mxu0 0.0
    %666 = vmatpush1.msra.mxu0 0.0
    %667 = vmatprep.subr.mxu0 0.0
    %668 = vmatpush1.msra.mxu0 0.0
    %669 = vmatprep.subr.mxu0 0.0
    %670 = vmatpush1.msra.mxu0 0.0
    %671 = vmatprep.subr.mxu0 0.0
    %672 = vmatpush1.msra.mxu0 0.0
    %673 = vmatprep.subr.mxu0 0.0
    %674 = vmatpush1.msra.mxu0 0.0
    %675 = vmatprep.subr.mxu0 0.0
    %676 = vmatpush1.msra.mxu0 0.0
    %677 = vmatprep.subr.mxu0 0.0
    %678 = vmatpush1.msra.mxu0 0.0
    %679 = vmatprep.subr.mxu0 0.0
    %680 = vmatpush1.msra.mxu0 0.0
    %681 = vmatprep.subr.mxu0 0.0
    %682 = vmatpush1.msra.mxu0 0.0
    %683 = vmatprep.subr.mxu0 0.0
    %684 = vmatpush1.msra.mxu0 0.0
    %685 = vmatprep.subr.mxu0 0.0
    %686 = vmatpush1.msra.mxu0 0.0
    %687 = vmatprep.subr.mxu0 0.0
    %688 = vmatpush1.msra.mxu0 0.0
    %689 = vmatprep.subr.mxu0 0.0
    %690 = vmatpush1.msra.mxu0 0.0
    %691 = vmatprep.subr.mxu0 0.0
    %692 = vmatpush1.msra.mxu0 0.0
    %693 = vmatprep.subr.mxu0 0.0
    %694 = vmatpush1.msra.mxu0 0.0
    %695 = vmatprep.subr.mxu0 0.0
    %696 = vmatpush1.msra.mxu0 0.0
    %697 = vmatprep.subr.mxu0 0.0
    %698 = vmatpush1.msra.mxu0 0.0
    %699 = vmatprep.subr.mxu0 0.0
    %700 = vmatpush1.msra.mxu0 0.0
    %701 = vmatprep.subr.mxu0 0.0
    %702 = vmatpush1.msra.mxu0 0.0
    %703 = vmatprep.subr.mxu0 0.0
    %704 = vmatpush1.msra.mxu0 0.0
    %705 = vmatprep.subr.mxu0 0.0
    %706 = vmatpush1.msra.mxu0 0.0
    %707 = vmatprep.mubr.f32.mxu0 0.0
    %v708 = vand.u32 %v90, 4294901760
    %v709 = vsub.f32 %v90, %v708
    %v710 = vand.u32 %v709, 4294901760
    %v711 = vsub.f32 %v709, %v710
    %v712 = vand.u32 %v711, 4294901760
    %713 = vmatmul.mubr.f32.gmra.mrb[0].mxu0 %v712
    %v714 = vpop.f32.mrb[0].mxu0
    %v715 = vadd.f32 0.0, %v714
    %v716 = vpop.f32.mrb[0].mxu0
    %v717 = vadd.f32 0.0, %v716
    %718 = vdwg.mxu0
    %v719 = vand.u32 %v59, 4294901760
    %v720 = vsub.f32 %v59, %v719
    %v721 = vand.u32 %v720, 4294901760
    %v722 = vsub.f32 %v720, %v721
    %v723 = vand.u32 %v722, 4294901760
    %724 = vmatprep.subr.mxu0 %v723
    %v725 = vand.u32 %v58, 4294901760
    %v726 = vsub.f32 %v58, %v725
    %v727 = vand.u32 %v726, 4294901760
    %v728 = vsub.f32 %v726, %v727
    %v729 = vand.u32 %v728, 4294901760
    %730 = vmatpush1.msra.mxu0 %v729
    %v731 = vand.u32 %v67, 4294901760
    %v732 = vsub.f32 %v67, %v731
    %v733 = vand.u32 %v732, 4294901760
    %v734 = vsub.f32 %v732, %v733
    %v735 = vand.u32 %v734, 4294901760
    %736 = vmatprep.subr.mxu0 %v735
    %v737 = vand.u32 %v66, 4294901760
    %v738 = vsub.f32 %v66, %v737
    %v739 = vand.u32 %v738, 4294901760
    %v740 = vsub.f32 %v738, %v739
    %v741 = vand.u32 %v740, 4294901760
    %742 = vmatpush1.msra.mxu0 %v741
    %v743 = vand.u32 %v75, 4294901760
    %v744 = vsub.f32 %v75, %v743
    %v745 = vand.u32 %v744, 4294901760
    %v746 = vsub.f32 %v744, %v745
    %v747 = vand.u32 %v746, 4294901760
    %748 = vmatprep.subr.mxu0 %v747
    %v749 = vand.u32 %v74, 4294901760
    %v750 = vsub.f32 %v74, %v749
    %v751 = vand.u32 %v750, 4294901760
    %v752 = vsub.f32 %v750, %v751
    %v753 = vand.u32 %v752, 4294901760
    %754 = vmatpush1.msra.mxu0 %v753
    %v755 = vand.u32 %v83, 4294901760
    %v756 = vsub.f32 %v83, %v755
    %v757 = vand.u32 %v756, 4294901760
    %v758 = vsub.f32 %v756, %v757
    %v759 = vand.u32 %v758, 4294901760
    %760 = vmatprep.subr.mxu0 %v759
    %v761 = vand.u32 %v82, 4294901760
    %v762 = vsub.f32 %v82, %v761
    %v763 = vand.u32 %v762, 4294901760
    %v764 = vsub.f32 %v762, %v763
    %v765 = vand.u32 %v764, 4294901760
    %766 = vmatpush1.msra.mxu0 %v765
    %767 = vmatprep.subr.mxu0 0.0
    %768 = vmatpush1.msra.mxu0 0.0
    %769 = vmatprep.subr.mxu0 0.0
    %770 = vmatpush1.msra.mxu0 0.0
    %771 = vmatprep.subr.mxu0 0.0
    %772 = vmatpush1.msra.mxu0 0.0
    %773 = vmatprep.subr.mxu0 0.0
    %774 = vmatpush1.msra.mxu0 0.0
    %775 = vmatprep.subr.mxu0 0.0
    %776 = vmatpush1.msra.mxu0 0.0
    %777 = vmatprep.subr.mxu0 0.0
    %778 = vmatpush1.msra.mxu0 0.0
    %779 = vmatprep.subr.mxu0 0.0
    %780 = vmatpush1.msra.mxu0 0.0
    %781 = vmatprep.subr.mxu0 0.0
    %782 = vmatpush1.msra.mxu0 0.0
    %783 = vmatprep.subr.mxu0 0.0
    %784 = vmatpush1.msra.mxu0 0.0
    %785 = vmatprep.subr.mxu0 0.0
    %786 = vmatpush1.msra.mxu0 0.0
    %787 = vmatprep.subr.mxu0 0.0
    %788 = vmatpush1.msra.mxu0 0.0
    %789 = vmatprep.subr.mxu0 0.0
    %790 = vmatpush1.msra.mxu0 0.0
    %791 = vmatprep.subr.mxu0 0.0
    %792 = vmatpush1.msra.mxu0 0.0
    %793 = vmatprep.subr.mxu0 0.0
    %794 = vmatpush1.msra.mxu0 0.0
    %795 = vmatprep.subr.mxu0 0.0
    %796 = vmatpush1.msra.mxu0 0.0
    %797 = vmatprep.subr.mxu0 0.0
    %798 = vmatpush1.msra.mxu0 0.0
    %799 = vmatprep.subr.mxu0 0.0
    %800 = vmatpush1.msra.mxu0 0.0
    %801 = vmatprep.subr.mxu0 0.0
    %802 = vmatpush1.msra.mxu0 0.0
    %803 = vmatprep.subr.mxu0 0.0
    %804 = vmatpush1.msra.mxu0 0.0
    %805 = vmatprep.subr.mxu0 0.0
    %806 = vmatpush1.msra.mxu0 0.0
    %807 = vmatprep.subr.mxu0 0.0
    %808 = vmatpush1.msra.mxu0 0.0
    %809 = vmatprep.subr.mxu0 0.0
    %810 = vmatpush1.msra.mxu0 0.0
    %811 = vmatprep.subr.mxu0 0.0
    %812 = vmatpush1.msra.mxu0 0.0
    %813 = vmatprep.subr.mxu0 0.0
    %814 = vmatpush1.msra.mxu0 0.0
    %815 = vmatprep.subr.mxu0 0.0
    %816 = vmatpush1.msra.mxu0 0.0
    %817 = vmatprep.subr.mxu0 0.0
    %818 = vmatpush1.msra.mxu0 0.0
    %819 = vmatprep.subr.mxu0 0.0
    %820 = vmatpush1.msra.mxu0 0.0
    %821 = vmatprep.subr.mxu0 0.0
    %822 = vmatpush1.msra.mxu0 0.0
    %823 = vmatprep.mubr.f32.mxu0 0.0
    %v824 = vand.u32 %v90, 4294901760
    %825 = vmatmul.mubr.f32.gmra.mrb[0].mxu0 %v824
    %v826 = vpop.f32.mrb[0].mxu0
    %v827 = vadd.f32 %v715, %v826
    %v828 = vpop.f32.mrb[0].mxu0
    %v829 = vadd.f32 %v717, %v828
    %830 = vdwg.mxu0
    %v831 = vand.u32 %v59, 4294901760
    %v832 = vsub.f32 %v59, %v831
    %833 = vmatprep.subr.mxu0 %v832
    %v834 = vand.u32 %v58, 4294901760
    %v835 = vsub.f32 %v58, %v834
    %836 = vmatpush1.msra.mxu0 %v835
    %v837 = vand.u32 %v67, 4294901760
    %v838 = vsub.f32 %v67, %v837
    %839 = vmatprep.subr.mxu0 %v838
    %v840 = vand.u32 %v66, 4294901760
    %v841 = vsub.f32 %v66, %v840
    %842 = vmatpush1.msra.mxu0 %v841
    %v843 = vand.u32 %v75, 4294901760
    %v844 = vsub.f32 %v75, %v843
    %845 = vmatprep.subr.mxu0 %v844
    %v846 = vand.u32 %v74, 4294901760
    %v847 = vsub.f32 %v74, %v846
    %848 = vmatpush1.msra.mxu0 %v847
    %v849 = vand.u32 %v83, 4294901760
    %v850 = vsub.f32 %v83, %v849
    %851 = vmatprep.subr.mxu0 %v850
    %v852 = vand.u32 %v82, 4294901760
    %v853 = vsub.f32 %v82, %v852
    %854 = vmatpush1.msra.mxu0 %v853
    %855 = vmatprep.subr.mxu0 0.0
    %856 = vmatpush1.msra.mxu0 0.0
    %857 = vmatprep.subr.mxu0 0.0
    %858 = vmatpush1.msra.mxu0 0.0
    %859 = vmatprep.subr.mxu0 0.0
    %860 = vmatpush1.msra.mxu0 0.0
    %861 = vmatprep.subr.mxu0 0.0
    %862 = vmatpush1.msra.mxu0 0.0
    %863 = vmatprep.subr.mxu0 0.0
    %864 = vmatpush1.msra.mxu0 0.0
    %865 = vmatprep.subr.mxu0 0.0
    %866 = vmatpush1.msra.mxu0 0.0
    %867 = vmatprep.subr.mxu0 0.0
    %868 = vmatpush1.msra.mxu0 0.0
    %869 = vmatprep.subr.mxu0 0.0
    %870 = vmatpush1.msra.mxu0 0.0
    %871 = vmatprep.subr.mxu0 0.0
    %872 = vmatpush1.msra.mxu0 0.0
    %873 = vmatprep.subr.mxu0 0.0
    %874 = vmatpush1.msra.mxu0 0.0
    %875 = vmatprep.subr.mxu0 0.0
    %876 = vmatpush1.msra.mxu0 0.0
    %877 = vmatprep.subr.mxu0 0.0
    %878 = vmatpush1.msra.mxu0 0.0
    %879 = vmatprep.subr.mxu0 0.0
    %880 = vmatpush1.msra.mxu0 0.0
    %881 = vmatprep.subr.mxu0 0.0
    %882 = vmatpush1.msra.mxu0 0.0
    %883 = vmatprep.subr.mxu0 0.0
    %884 = vmatpush1.msra.mxu0 0.0
    %885 = vmatprep.subr.mxu0 0.0
    %886 = vmatpush1.msra.mxu0 0.0
    %887 = vmatprep.subr.mxu0 0.0
    %888 = vmatpush1.msra.mxu0 0.0
    %889 = vmatprep.subr.mxu0 0.0
    %890 = vmatpush1.msra.mxu0 0.0
    %891 = vmatprep.subr.mxu0 0.0
    %892 = vmatpush1.msra.mxu0 0.0
    %893 = vmatprep.subr.mxu0 0.0
    %894 = vmatpush1.msra.mxu0 0.0
    %895 = vmatprep.subr.mxu0 0.0
    %896 = vmatpush1.msra.mxu0 0.0
    %897 = vmatprep.subr.mxu0 0.0
    %898 = vmatpush1.msra.mxu0 0.0
    %899 = vmatprep.subr.mxu0 0.0
    %900 = vmatpush1.msra.mxu0 0.0
    %901 = vmatprep.subr.mxu0 0.0
    %902 = vmatpush1.msra.mxu0 0.0
    %903 = vmatprep.subr.mxu0 0.0
    %904 = vmatpush1.msra.mxu0 0.0
    %905 = vmatprep.subr.mxu0 0.0
    %906 = vmatpush1.msra.mxu0 0.0
    %907 = vmatprep.subr.mxu0 0.0
    %908 = vmatpush1.msra.mxu0 0.0
    %909 = vmatprep.subr.mxu0 0.0
    %910 = vmatpush1.msra.mxu0 0.0
    %911 = vmatprep.mubr.f32.mxu0 0.0
    %v912 = vand.u32 %v90, 4294901760
    %v913 = vsub.f32 %v90, %v912
    %914 = vmatmul.mubr.f32.gmra.mrb[0].mxu0 %v913
    %v915 = vpop.f32.mrb[0].mxu0
    %v916 = vadd.f32 %v827, %v915
    %v917 = vpop.f32.mrb[0].mxu0
    %v918 = vadd.f32 %v829, %v917
    %919 = vdwg.mxu0
    %v920 = vand.u32 %v59, 4294901760
    %921 = vmatprep.subr.mxu0 %v920
    %v922 = vand.u32 %v58, 4294901760
    %923 = vmatpush1.msra.mxu0 %v922
    %v924 = vand.u32 %v67, 4294901760
    %925 = vmatprep.subr.mxu0 %v924
    %v926 = vand.u32 %v66, 4294901760
    %927 = vmatpush1.msra.mxu0 %v926
    %v928 = vand.u32 %v75, 4294901760
    %929 = vmatprep.subr.mxu0 %v928
    %v930 = vand.u32 %v74, 4294901760
    %931 = vmatpush1.msra.mxu0 %v930
    %v932 = vand.u32 %v83, 4294901760
    %933 = vmatprep.subr.mxu0 %v932
    %v934 = vand.u32 %v82, 4294901760
    %935 = vmatpush1.msra.mxu0 %v934
    %936 = vmatprep.subr.mxu0 0.0
    %937 = vmatpush1.msra.mxu0 0.0
    %938 = vmatprep.subr.mxu0 0.0
    %939 = vmatpush1.msra.mxu0 0.0
    %940 = vmatprep.subr.mxu0 0.0
    %941 = vmatpush1.msra.mxu0 0.0
    %942 = vmatprep.subr.mxu0 0.0
    %943 = vmatpush1.msra.mxu0 0.0
    %944 = vmatprep.subr.mxu0 0.0
    %945 = vmatpush1.msra.mxu0 0.0
    %946 = vmatprep.subr.mxu0 0.0
    %947 = vmatpush1.msra.mxu0 0.0
    %948 = vmatprep.subr.mxu0 0.0
    %949 = vmatpush1.msra.mxu0 0.0
    %950 = vmatprep.subr.mxu0 0.0
    %951 = vmatpush1.msra.mxu0 0.0
    %952 = vmatprep.subr.mxu0 0.0
    %953 = vmatpush1.msra.mxu0 0.0
    %954 = vmatprep.subr.mxu0 0.0
    %955 = vmatpush1.msra.mxu0 0.0
    %956 = vmatprep.subr.mxu0 0.0
    %957 = vmatpush1.msra.mxu0 0.0
    %958 = vmatprep.subr.mxu0 0.0
    %959 = vmatpush1.msra.mxu0 0.0
    %960 = vmatprep.subr.mxu0 0.0
    %961 = vmatpush1.msra.mxu0 0.0
    %962 = vmatprep.subr.mxu0 0.0
    %963 = vmatpush1.msra.mxu0 0.0
    %964 = vmatprep.subr.mxu0 0.0
    %965 = vmatpush1.msra.mxu0 0.0
    %966 = vmatprep.subr.mxu0 0.0
    %967 = vmatpush1.msra.mxu0 0.0
    %968 = vmatprep.subr.mxu0 0.0
    %969 = vmatpush1.msra.mxu0 0.0
    %970 = vmatprep.subr.mxu0 0.0
    %971 = vmatpush1.msra.mxu0 0.0
    %972 = vmatprep.subr.mxu0 0.0
    %973 = vmatpush1.msra.mxu0 0.0
    %974 = vmatprep.subr.mxu0 0.0
    %975 = vmatpush1.msra.mxu0 0.0
    %976 = vmatprep.subr.mxu0 0.0
    %977 = vmatpush1.msra.mxu0 0.0
    %978 = vmatprep.subr.mxu0 0.0
    %979 = vmatpush1.msra.mxu0 0.0
    %980 = vmatprep.subr.mxu0 0.0
    %981 = vmatpush1.msra.mxu0 0.0
    %982 = vmatprep.subr.mxu0 0.0
    %983 = vmatpush1.msra.mxu0 0.0
    %984 = vmatprep.subr.mxu0 0.0
    %985 = vmatpush1.msra.mxu0 0.0
    %986 = vmatprep.subr.mxu0 0.0
    %987 = vmatpush1.msra.mxu0 0.0
    %988 = vmatprep.subr.mxu0 0.0
    %989 = vmatpush1.msra.mxu0 0.0
    %990 = vmatprep.subr.mxu0 0.0
    %991 = vmatpush1.msra.mxu0 0.0
    %992 = vmatprep.mubr.f32.mxu0 0.0
    %v993 = vand.u32 %v90, 4294901760
    %v994 = vsub.f32 %v90, %v993
    %v995 = vand.u32 %v994, 4294901760
    %996 = vmatmul.mubr.f32.gmra.mrb[0].mxu0 %v995
    %v997 = vpop.f32.mrb[0].mxu0
    %v998 = vadd.f32 %v916, %v997
    %v999 = vpop.f32.mrb[0].mxu0
    %v1000 = vadd.f32 %v918, %v999
    %1001 = vdwg.mxu0
    %v1002 = vand.u32 %v59, 4294901760
    %v1003 = vsub.f32 %v59, %v1002
    %v1004 = vand.u32 %v1003, 4294901760
    %1005 = vmatprep.subr.mxu0 %v1004
    %v1006 = vand.u32 %v58, 4294901760
    %v1007 = vsub.f32 %v58, %v1006
    %v1008 = vand.u32 %v1007, 4294901760
    %1009 = vmatpush1.msra.mxu0 %v1008
    %v1010 = vand.u32 %v67, 4294901760
    %v1011 = vsub.f32 %v67, %v1010
    %v1012 = vand.u32 %v1011, 4294901760
    %1013 = vmatprep.subr.mxu0 %v1012
    %v1014 = vand.u32 %v66, 4294901760
    %v1015 = vsub.f32 %v66, %v1014
    %v1016 = vand.u32 %v1015, 4294901760
    %1017 = vmatpush1.msra.mxu0 %v1016
    %v1018 = vand.u32 %v75, 4294901760
    %v1019 = vsub.f32 %v75, %v1018
    %v1020 = vand.u32 %v1019, 4294901760
    %1021 = vmatprep.subr.mxu0 %v1020
    %v1022 = vand.u32 %v74, 4294901760
    %v1023 = vsub.f32 %v74, %v1022
    %v1024 = vand.u32 %v1023, 4294901760
    %1025 = vmatpush1.msra.mxu0 %v1024
    %v1026 = vand.u32 %v83, 4294901760
    %v1027 = vsub.f32 %v83, %v1026
    %v1028 = vand.u32 %v1027, 4294901760
    %1029 = vmatprep.subr.mxu0 %v1028
    %v1030 = vand.u32 %v82, 4294901760
    %v1031 = vsub.f32 %v82, %v1030
    %v1032 = vand.u32 %v1031, 4294901760
    %1033 = vmatpush1.msra.mxu0 %v1032
    %1034 = vmatprep.subr.mxu0 0.0
    %1035 = vmatpush1.msra.mxu0 0.0
    %1036 = vmatprep.subr.mxu0 0.0
    %1037 = vmatpush1.msra.mxu0 0.0
    %1038 = vmatprep.subr.mxu0 0.0
    %1039 = vmatpush1.msra.mxu0 0.0
    %1040 = vmatprep.subr.mxu0 0.0
    %1041 = vmatpush1.msra.mxu0 0.0
    %1042 = vmatprep.subr.mxu0 0.0
    %1043 = vmatpush1.msra.mxu0 0.0
    %1044 = vmatprep.subr.mxu0 0.0
    %1045 = vmatpush1.msra.mxu0 0.0
    %1046 = vmatprep.subr.mxu0 0.0
    %1047 = vmatpush1.msra.mxu0 0.0
    %1048 = vmatprep.subr.mxu0 0.0
    %1049 = vmatpush1.msra.mxu0 0.0
    %1050 = vmatprep.subr.mxu0 0.0
    %1051 = vmatpush1.msra.mxu0 0.0
    %1052 = vmatprep.subr.mxu0 0.0
    %1053 = vmatpush1.msra.mxu0 0.0
    %1054 = vmatprep.subr.mxu0 0.0
    %1055 = vmatpush1.msra.mxu0 0.0
    %1056 = vmatprep.subr.mxu0 0.0
    %1057 = vmatpush1.msra.mxu0 0.0
    %1058 = vmatprep.subr.mxu0 0.0
    %1059 = vmatpush1.msra.mxu0 0.0
    %1060 = vmatprep.subr.mxu0 0.0
    %1061 = vmatpush1.msra.mxu0 0.0
    %1062 = vmatprep.subr.mxu0 0.0
    %1063 = vmatpush1.msra.mxu0 0.0
    %1064 = vmatprep.subr.mxu0 0.0
    %1065 = vmatpush1.msra.mxu0 0.0
    %1066 = vmatprep.subr.mxu0 0.0
    %1067 = vmatpush1.msra.mxu0 0.0
    %1068 = vmatprep.subr.mxu0 0.0
    %1069 = vmatpush1.msra.mxu0 0.0
    %1070 = vmatprep.subr.mxu0 0.0
    %1071 = vmatpush1.msra.mxu0 0.0
    %1072 = vmatprep.subr.mxu0 0.0
    %1073 = vmatpush1.msra.mxu0 0.0
    %1074 = vmatprep.subr.mxu0 0.0
    %1075 = vmatpush1.msra.mxu0 0.0
    %1076 = vmatprep.subr.mxu0 0.0
    %1077 = vmatpush1.msra.mxu0 0.0
    %1078 = vmatprep.subr.mxu0 0.0
    %1079 = vmatpush1.msra.mxu0 0.0
    %1080 = vmatprep.subr.mxu0 0.0
    %1081 = vmatpush1.msra.mxu0 0.0
    %1082 = vmatprep.subr.mxu0 0.0
    %1083 = vmatpush1.msra.mxu0 0.0
    %1084 = vmatprep.subr.mxu0 0.0
    %1085 = vmatpush1.msra.mxu0 0.0
    %1086 = vmatprep.subr.mxu0 0.0
    %1087 = vmatpush1.msra.mxu0 0.0
    %1088 = vmatprep.subr.mxu0 0.0
    %1089 = vmatpush1.msra.mxu0 0.0
    %1090 = vmatprep.mubr.f32.mxu0 0.0
    %v1091 = vand.u32 %v90, 4294901760
    %1092 = vmatmul.mubr.f32.gmra.mrb[0].mxu0 %v1091
    %v1093 = vpop.f32.mrb[0].mxu0
    %v1094 = vadd.f32 %v998, %v1093
    %v1095 = vpop.f32.mrb[0].mxu0
    %v1096 = vadd.f32 %v1000, %v1095
    %1097 = vdwg.mxu0
    %v1098 = vand.u32 %v59, 4294901760
    %1099 = vmatprep.subr.mxu0 %v1098
    %v1100 = vand.u32 %v58, 4294901760
    %1101 = vmatpush1.msra.mxu0 %v1100
    %v1102 = vand.u32 %v67, 4294901760
    %1103 = vmatprep.subr.mxu0 %v1102
    %v1104 = vand.u32 %v66, 4294901760
    %1105 = vmatpush1.msra.mxu0 %v1104
    %v1106 = vand.u32 %v75, 4294901760
    %1107 = vmatprep.subr.mxu0 %v1106
    %v1108 = vand.u32 %v74, 4294901760
    %1109 = vmatpush1.msra.mxu0 %v1108
    %v1110 = vand.u32 %v83, 4294901760
    %1111 = vmatprep.subr.mxu0 %v1110
    %v1112 = vand.u32 %v82, 4294901760
    %1113 = vmatpush1.msra.mxu0 %v1112
    %1114 = vmatprep.subr.mxu0 0.0
    %1115 = vmatpush1.msra.mxu0 0.0
    %1116 = vmatprep.subr.mxu0 0.0
    %1117 = vmatpush1.msra.mxu0 0.0
    %1118 = vmatprep.subr.mxu0 0.0
    %1119 = vmatpush1.msra.mxu0 0.0
    %1120 = vmatprep.subr.mxu0 0.0
    %1121 = vmatpush1.msra.mxu0 0.0
    %1122 = vmatprep.subr.mxu0 0.0
    %1123 = vmatpush1.msra.mxu0 0.0
    %1124 = vmatprep.subr.mxu0 0.0
    %1125 = vmatpush1.msra.mxu0 0.0
    %1126 = vmatprep.subr.mxu0 0.0
    %1127 = vmatpush1.msra.mxu0 0.0
    %1128 = vmatprep.subr.mxu0 0.0
    %1129 = vmatpush1.msra.mxu0 0.0
    %1130 = vmatprep.subr.mxu0 0.0
    %1131 = vmatpush1.msra.mxu0 0.0
    %1132 = vmatprep.subr.mxu0 0.0
    %1133 = vmatpush1.msra.mxu0 0.0
    %1134 = vmatprep.subr.mxu0 0.0
    %1135 = vmatpush1.msra.mxu0 0.0
    %1136 = vmatprep.subr.mxu0 0.0
    %1137 = vmatpush1.msra.mxu0 0.0
    %1138 = vmatprep.subr.mxu0 0.0
    %1139 = vmatpush1.msra.mxu0 0.0
    %1140 = vmatprep.subr.mxu0 0.0
    %1141 = vmatpush1.msra.mxu0 0.0
    %1142 = vmatprep.subr.mxu0 0.0
    %1143 = vmatpush1.msra.mxu0 0.0
    %1144 = vmatprep.subr.mxu0 0.0
    %1145 = vmatpush1.msra.mxu0 0.0
    %1146 = vmatprep.subr.mxu0 0.0
    %1147 = vmatpush1.msra.mxu0 0.0
    %1148 = vmatprep.subr.mxu0 0.0
    %1149 = vmatpush1.msra.mxu0 0.0
    %1150 = vmatprep.subr.mxu0 0.0
    %1151 = vmatpush1.msra.mxu0 0.0
    %1152 = vmatprep.subr.mxu0 0.0
    %1153 = vmatpush1.msra.mxu0 0.0
    %1154 = vmatprep.subr.mxu0 0.0
    %1155 = vmatpush1.msra.mxu0 0.0
    %1156 = vmatprep.subr.mxu0 0.0
    %1157 = vmatpush1.msra.mxu0 0.0
    %1158 = vmatprep.subr.mxu0 0.0
    %1159 = vmatpush1.msra.mxu0 0.0
    %1160 = vmatprep.subr.mxu0 0.0
    %1161 = vmatpush1.msra.mxu0 0.0
    %1162 = vmatprep.subr.mxu0 0.0
    %1163 = vmatpush1.msra.mxu0 0.0
    %1164 = vmatprep.subr.mxu0 0.0
    %1165 = vmatpush1.msra.mxu0 0.0
    %1166 = vmatprep.subr.mxu0 0.0
    %1167 = vmatpush1.msra.mxu0 0.0
    %1168 = vmatprep.subr.mxu0 0.0
    %1169 = vmatpush1.msra.mxu0 0.0
    %1170 = vmatprep.mubr.f32.mxu0 0.0
    %v1171 = vand.u32 %v90, 4294901760
    %1172 = vmatmul.mubr.f32.gmra.mrb[0].mxu0 %v1171
    %v1173 = vpop.f32.mrb[0].mxu0
    %v1174 = vadd.f32 %v1094, %v1173
    %v1175 = vpop.f32.mrb[0].mxu0
    %v1176 = vadd.f32 %v1096, %v1175
    %1177 = vdwg.mxu0
    %v1178 = vand.u32 %v61, 4294901760
    %1179 = vmatprep.subr.mxu0 %v1178
    %v1180 = vand.u32 %v60, 4294901760
    %1181 = vmatpush1.msra.mxu0 %v1180
    %v1182 = vand.u32 %v69, 4294901760
    %1183 = vmatprep.subr.mxu0 %v1182
    %v1184 = vand.u32 %v68, 4294901760
    %1185 = vmatpush1.msra.mxu0 %v1184
    %v1186 = vand.u32 %v77, 4294901760
    %1187 = vmatprep.subr.mxu0 %v1186
    %v1188 = vand.u32 %v76, 4294901760
    %1189 = vmatpush1.msra.mxu0 %v1188
    %v1190 = vand.u32 %v85, 4294901760
    %1191 = vmatprep.subr.mxu0 %v1190
    %v1192 = vand.u32 %v84, 4294901760
    %1193 = vmatpush1.msra.mxu0 %v1192
    %1194 = vmatprep.subr.mxu0 0.0
    %1195 = vmatpush1.msra.mxu0 0.0
    %1196 = vmatprep.subr.mxu0 0.0
    %1197 = vmatpush1.msra.mxu0 0.0
    %1198 = vmatprep.subr.mxu0 0.0
    %1199 = vmatpush1.msra.mxu0 0.0
    %1200 = vmatprep.subr.mxu0 0.0
    %1201 = vmatpush1.msra.mxu0 0.0
    %1202 = vmatprep.subr.mxu0 0.0
    %1203 = vmatpush1.msra.mxu0 0.0
    %1204 = vmatprep.subr.mxu0 0.0
    %1205 = vmatpush1.msra.mxu0 0.0
    %1206 = vmatprep.subr.mxu0 0.0
    %1207 = vmatpush1.msra.mxu0 0.0
    %1208 = vmatprep.subr.mxu0 0.0
    %1209 = vmatpush1.msra.mxu0 0.0
    %1210 = vmatprep.subr.mxu0 0.0
    %1211 = vmatpush1.msra.mxu0 0.0
    %1212 = vmatprep.subr.mxu0 0.0
    %1213 = vmatpush1.msra.mxu0 0.0
    %1214 = vmatprep.subr.mxu0 0.0
    %1215 = vmatpush1.msra.mxu0 0.0
    %1216 = vmatprep.subr.mxu0 0.0
    %1217 = vmatpush1.msra.mxu0 0.0
    %1218 = vmatprep.subr.mxu0 0.0
    %1219 = vmatpush1.msra.mxu0 0.0
    %1220 = vmatprep.subr.mxu0 0.0
    %1221 = vmatpush1.msra.mxu0 0.0
    %1222 = vmatprep.subr.mxu0 0.0
    %1223 = vmatpush1.msra.mxu0 0.0
    %1224 = vmatprep.subr.mxu0 0.0
    %1225 = vmatpush1.msra.mxu0 0.0
    %1226 = vmatprep.subr.mxu0 0.0
    %1227 = vmatpush1.msra.mxu0 0.0
    %1228 = vmatprep.subr.mxu0 0.0
    %1229 = vmatpush1.msra.mxu0 0.0
    %1230 = vmatprep.subr.mxu0 0.0
    %1231 = vmatpush1.msra.mxu0 0.0
    %1232 = vmatprep.subr.mxu0 0.0
    %1233 = vmatpush1.msra.mxu0 0.0
    %1234 = vmatprep.subr.mxu0 0.0
    %1235 = vmatpush1.msra.mxu0 0.0
    %1236 = vmatprep.subr.mxu0 0.0
    %1237 = vmatpush1.msra.mxu0 0.0
    %1238 = vmatprep.subr.mxu0 0.0
    %1239 = vmatpush1.msra.mxu0 0.0
    %1240 = vmatprep.subr.mxu0 0.0
    %1241 = vmatpush1.msra.mxu0 0.0
    %1242 = vmatprep.subr.mxu0 0.0
    %1243 = vmatpush1.msra.mxu0 0.0
    %1244 = vmatprep.subr.mxu0 0.0
    %1245 = vmatpush1.msra.mxu0 0.0
    %1246 = vmatprep.subr.mxu0 0.0
    %1247 = vmatpush1.msra.mxu0 0.0
    %1248 = vmatprep.subr.mxu0 0.0
    %1249 = vmatpush1.msra.mxu0 0.0
    %1250 = vmatprep.mubr.f32.mxu0 0.0
    %v1251 = vand.u32 %v90, 4294901760
    %v1252 = vsub.f32 %v90, %v1251
    %v1253 = vand.u32 %v1252, 4294901760
    %v1254 = vsub.f32 %v1252, %v1253
    %v1255 = vand.u32 %v1254, 4294901760
    %1256 = vmatmul.mubr.f32.gmra.mrb[0].mxu0 %v1255
    %v1257 = vpop.f32.mrb[0].mxu0
    %v1258 = vadd.f32 0.0, %v1257
    %v1259 = vpop.f32.mrb[0].mxu0
    %v1260 = vadd.f32 0.0, %v1259
    %1261 = vdwg.mxu0
    %v1262 = vand.u32 %v61, 4294901760
    %v1263 = vsub.f32 %v61, %v1262
    %v1264 = vand.u32 %v1263, 4294901760
    %v1265 = vsub.f32 %v1263, %v1264
    %v1266 = vand.u32 %v1265, 4294901760
    %1267 = vmatprep.subr.mxu0 %v1266
    %v1268 = vand.u32 %v60, 4294901760
    %v1269 = vsub.f32 %v60, %v1268
    %v1270 = vand.u32 %v1269, 4294901760
    %v1271 = vsub.f32 %v1269, %v1270
    %v1272 = vand.u32 %v1271, 4294901760
    %1273 = vmatpush1.msra.mxu0 %v1272
    %v1274 = vand.u32 %v69, 4294901760
    %v1275 = vsub.f32 %v69, %v1274
    %v1276 = vand.u32 %v1275, 4294901760
    %v1277 = vsub.f32 %v1275, %v1276
    %v1278 = vand.u32 %v1277, 4294901760
    %1279 = vmatprep.subr.mxu0 %v1278
    %v1280 = vand.u32 %v68, 4294901760
    %v1281 = vsub.f32 %v68, %v1280
    %v1282 = vand.u32 %v1281, 4294901760
    %v1283 = vsub.f32 %v1281, %v1282
    %v1284 = vand.u32 %v1283, 4294901760
    %1285 = vmatpush1.msra.mxu0 %v1284
    %v1286 = vand.u32 %v77, 4294901760
    %v1287 = vsub.f32 %v77, %v1286
    %v1288 = vand.u32 %v1287, 4294901760
    %v1289 = vsub.f32 %v1287, %v1288
    %v1290 = vand.u32 %v1289, 4294901760
    %1291 = vmatprep.subr.mxu0 %v1290
    %v1292 = vand.u32 %v76, 4294901760
    %v1293 = vsub.f32 %v76, %v1292
    %v1294 = vand.u32 %v1293, 4294901760
    %v1295 = vsub.f32 %v1293, %v1294
    %v1296 = vand.u32 %v1295, 4294901760
    %1297 = vmatpush1.msra.mxu0 %v1296
    %v1298 = vand.u32 %v85, 4294901760
    %v1299 = vsub.f32 %v85, %v1298
    %v1300 = vand.u32 %v1299, 4294901760
    %v1301 = vsub.f32 %v1299, %v1300
    %v1302 = vand.u32 %v1301, 4294901760
    %1303 = vmatprep.subr.mxu0 %v1302
    %v1304 = vand.u32 %v84, 4294901760
    %v1305 = vsub.f32 %v84, %v1304
    %v1306 = vand.u32 %v1305, 4294901760
    %v1307 = vsub.f32 %v1305, %v1306
    %v1308 = vand.u32 %v1307, 4294901760
    %1309 = vmatpush1.msra.mxu0 %v1308
    %1310 = vmatprep.subr.mxu0 0.0
    %1311 = vmatpush1.msra.mxu0 0.0
    %1312 = vmatprep.subr.mxu0 0.0
    %1313 = vmatpush1.msra.mxu0 0.0
    %1314 = vmatprep.subr.mxu0 0.0
    %1315 = vmatpush1.msra.mxu0 0.0
    %1316 = vmatprep.subr.mxu0 0.0
    %1317 = vmatpush1.msra.mxu0 0.0
    %1318 = vmatprep.subr.mxu0 0.0
    %1319 = vmatpush1.msra.mxu0 0.0
    %1320 = vmatprep.subr.mxu0 0.0
    %1321 = vmatpush1.msra.mxu0 0.0
    %1322 = vmatprep.subr.mxu0 0.0
    %1323 = vmatpush1.msra.mxu0 0.0
    %1324 = vmatprep.subr.mxu0 0.0
    %1325 = vmatpush1.msra.mxu0 0.0
    %1326 = vmatprep.subr.mxu0 0.0
    %1327 = vmatpush1.msra.mxu0 0.0
    %1328 = vmatprep.subr.mxu0 0.0
    %1329 = vmatpush1.msra.mxu0 0.0
    %1330 = vmatprep.subr.mxu0 0.0
    %1331 = vmatpush1.msra.mxu0 0.0
    %1332 = vmatprep.subr.mxu0 0.0
    %1333 = vmatpush1.msra.mxu0 0.0
    %1334 = vmatprep.subr.mxu0 0.0
    %1335 = vmatpush1.msra.mxu0 0.0
    %1336 = vmatprep.subr.mxu0 0.0
    %1337 = vmatpush1.msra.mxu0 0.0
    %1338 = vmatprep.subr.mxu0 0.0
    %1339 = vmatpush1.msra.mxu0 0.0
    %1340 = vmatprep.subr.mxu0 0.0
    %1341 = vmatpush1.msra.mxu0 0.0
    %1342 = vmatprep.subr.mxu0 0.0
    %1343 = vmatpush1.msra.mxu0 0.0
    %1344 = vmatprep.subr.mxu0 0.0
    %1345 = vmatpush1.msra.mxu0 0.0
    %1346 = vmatprep.subr.mxu0 0.0
    %1347 = vmatpush1.msra.mxu0 0.0
    %1348 = vmatprep.subr.mxu0 0.0
    %1349 = vmatpush1.msra.mxu0 0.0
    %1350 = vmatprep.subr.mxu0 0.0
    %1351 = vmatpush1.msra.mxu0 0.0
    %1352 = vmatprep.subr.mxu0 0.0
    %1353 = vmatpush1.msra.mxu0 0.0
    %1354 = vmatprep.subr.mxu0 0.0
    %1355 = vmatpush1.msra.mxu0 0.0
    %1356 = vmatprep.subr.mxu0 0.0
    %1357 = vmatpush1.msra.mxu0 0.0
    %1358 = vmatprep.subr.mxu0 0.0
    %1359 = vmatpush1.msra.mxu0 0.0
    %1360 = vmatprep.subr.mxu0 0.0
    %1361 = vmatpush1.msra.mxu0 0.0
    %1362 = vmatprep.subr.mxu0 0.0
    %1363 = vmatpush1.msra.mxu0 0.0
    %1364 = vmatprep.subr.mxu0 0.0
    %1365 = vmatpush1.msra.mxu0 0.0
    %1366 = vmatprep.mubr.f32.mxu0 0.0
    %v1367 = vand.u32 %v90, 4294901760
    %1368 = vmatmul.mubr.f32.gmra.mrb[0].mxu0 %v1367
    %v1369 = vpop.f32.mrb[0].mxu0
    %v1370 = vadd.f32 %v1258, %v1369
    %v1371 = vpop.f32.mrb[0].mxu0
    %v1372 = vadd.f32 %v1260, %v1371
    %1373 = vdwg.mxu0
    %v1374 = vand.u32 %v61, 4294901760
    %v1375 = vsub.f32 %v61, %v1374
    %1376 = vmatprep.subr.mxu0 %v1375
    %v1377 = vand.u32 %v60, 4294901760
    %v1378 = vsub.f32 %v60, %v1377
    %1379 = vmatpush1.msra.mxu0 %v1378
    %v1380 = vand.u32 %v69, 4294901760
    %v1381 = vsub.f32 %v69, %v1380
    %1382 = vmatprep.subr.mxu0 %v1381
    %v1383 = vand.u32 %v68, 4294901760
    %v1384 = vsub.f32 %v68, %v1383
    %1385 = vmatpush1.msra.mxu0 %v1384
    %v1386 = vand.u32 %v77, 4294901760
    %v1387 = vsub.f32 %v77, %v1386
    %1388 = vmatprep.subr.mxu0 %v1387
    %v1389 = vand.u32 %v76, 4294901760
    %v1390 = vsub.f32 %v76, %v1389
    %1391 = vmatpush1.msra.mxu0 %v1390
    %v1392 = vand.u32 %v85, 4294901760
    %v1393 = vsub.f32 %v85, %v1392
    %1394 = vmatprep.subr.mxu0 %v1393
    %v1395 = vand.u32 %v84, 4294901760
    %v1396 = vsub.f32 %v84, %v1395
    %1397 = vmatpush1.msra.mxu0 %v1396
    %1398 = vmatprep.subr.mxu0 0.0
    %1399 = vmatpush1.msra.mxu0 0.0
    %1400 = vmatprep.subr.mxu0 0.0
    %1401 = vmatpush1.msra.mxu0 0.0
    %1402 = vmatprep.subr.mxu0 0.0
    %1403 = vmatpush1.msra.mxu0 0.0
    %1404 = vmatprep.subr.mxu0 0.0
    %1405 = vmatpush1.msra.mxu0 0.0
    %1406 = vmatprep.subr.mxu0 0.0
    %1407 = vmatpush1.msra.mxu0 0.0
    %1408 = vmatprep.subr.mxu0 0.0
    %1409 = vmatpush1.msra.mxu0 0.0
    %1410 = vmatprep.subr.mxu0 0.0
    %1411 = vmatpush1.msra.mxu0 0.0
    %1412 = vmatprep.subr.mxu0 0.0
    %1413 = vmatpush1.msra.mxu0 0.0
    %1414 = vmatprep.subr.mxu0 0.0
    %1415 = vmatpush1.msra.mxu0 0.0
    %1416 = vmatprep.subr.mxu0 0.0
    %1417 = vmatpush1.msra.mxu0 0.0
    %1418 = vmatprep.subr.mxu0 0.0
    %1419 = vmatpush1.msra.mxu0 0.0
    %1420 = vmatprep.subr.mxu0 0.0
    %1421 = vmatpush1.msra.mxu0 0.0
    %1422 = vmatprep.subr.mxu0 0.0
    %1423 = vmatpush1.msra.mxu0 0.0
    %1424 = vmatprep.subr.mxu0 0.0
    %1425 = vmatpush1.msra.mxu0 0.0
    %1426 = vmatprep.subr.mxu0 0.0
    %1427 = vmatpush1.msra.mxu0 0.0
    %1428 = vmatprep.subr.mxu0 0.0
    %1429 = vmatpush1.msra.mxu0 0.0
    %1430 = vmatprep.subr.mxu0 0.0
    %1431 = vmatpush1.msra.mxu0 0.0
    %1432 = vmatprep.subr.mxu0 0.0
    %1433 = vmatpush1.msra.mxu0 0.0
    %1434 = vmatprep.subr.mxu0 0.0
    %1435 = vmatpush1.msra.mxu0 0.0
    %1436 = vmatprep.subr.mxu0 0.0
    %1437 = vmatpush1.msra.mxu0 0.0
    %1438 = vmatprep.subr.mxu0 0.0
    %1439 = vmatpush1.msra.mxu0 0.0
    %1440 = vmatprep.subr.mxu0 0.0
    %1441 = vmatpush1.msra.mxu0 0.0
    %1442 = vmatprep.subr.mxu0 0.0
    %1443 = vmatpush1.msra.mxu0 0.0
    %1444 = vmatprep.subr.mxu0 0.0
    %1445 = vmatpush1.msra.mxu0 0.0
    %1446 = vmatprep.subr.mxu0 0.0
    %1447 = vmatpush1.msra.mxu0 0.0
    %1448 = vmatprep.subr.mxu0 0.0
    %1449 = vmatpush1.msra.mxu0 0.0
    %1450 = vmatprep.subr.mxu0 0.0
    %1451 = vmatpush1.msra.mxu0 0.0
    %1452 = vmatprep.subr.mxu0 0.0
    %1453 = vmatpush1.msra.mxu0 0.0
    %1454 = vmatprep.mubr.f32.mxu0 0.0
    %v1455 = vand.u32 %v90, 4294901760
    %v1456 = vsub.f32 %v90, %v1455
    %1457 = vmatmul.mubr.f32.gmra.mrb[0].mxu0 %v1456
    %v1458 = vpop.f32.mrb[0].mxu0
    %v1459 = vadd.f32 %v1370, %v1458
    %v1460 = vpop.f32.mrb[0].mxu0
    %v1461 = vadd.f32 %v1372, %v1460
    %1462 = vdwg.mxu0
    %v1463 = vand.u32 %v61, 4294901760
    %1464 = vmatprep.subr.mxu0 %v1463
    %v1465 = vand.u32 %v60, 4294901760
    %1466 = vmatpush1.msra.mxu0 %v1465
    %v1467 = vand.u32 %v69, 4294901760
    %1468 = vmatprep.subr.mxu0 %v1467
    %v1469 = vand.u32 %v68, 4294901760
    %1470 = vmatpush1.msra.mxu0 %v1469
    %v1471 = vand.u32 %v77, 4294901760
    %1472 = vmatprep.subr.mxu0 %v1471
    %v1473 = vand.u32 %v76, 4294901760
    %1474 = vmatpush1.msra.mxu0 %v1473
    %v1475 = vand.u32 %v85, 4294901760
    %1476 = vmatprep.subr.mxu0 %v1475
    %v1477 = vand.u32 %v84, 4294901760
    %1478 = vmatpush1.msra.mxu0 %v1477
    %1479 = vmatprep.subr.mxu0 0.0
    %1480 = vmatpush1.msra.mxu0 0.0
    %1481 = vmatprep.subr.mxu0 0.0
    %1482 = vmatpush1.msra.mxu0 0.0
    %1483 = vmatprep.subr.mxu0 0.0
    %1484 = vmatpush1.msra.mxu0 0.0
    %1485 = vmatprep.subr.mxu0 0.0
    %1486 = vmatpush1.msra.mxu0 0.0
    %1487 = vmatprep.subr.mxu0 0.0
    %1488 = vmatpush1.msra.mxu0 0.0
    %1489 = vmatprep.subr.mxu0 0.0
    %1490 = vmatpush1.msra.mxu0 0.0
    %1491 = vmatprep.subr.mxu0 0.0
    %1492 = vmatpush1.msra.mxu0 0.0
    %1493 = vmatprep.subr.mxu0 0.0
    %1494 = vmatpush1.msra.mxu0 0.0
    %1495 = vmatprep.subr.mxu0 0.0
    %1496 = vmatpush1.msra.mxu0 0.0
    %1497 = vmatprep.subr.mxu0 0.0
    %1498 = vmatpush1.msra.mxu0 0.0
    %1499 = vmatprep.subr.mxu0 0.0
    %1500 = vmatpush1.msra.mxu0 0.0
    %1501 = vmatprep.subr.mxu0 0.0
    %1502 = vmatpush1.msra.mxu0 0.0
    %1503 = vmatprep.subr.mxu0 0.0
    %1504 = vmatpush1.msra.mxu0 0.0
    %1505 = vmatprep.subr.mxu0 0.0
    %1506 = vmatpush1.msra.mxu0 0.0
    %1507 = vmatprep.subr.mxu0 0.0
    %1508 = vmatpush1.msra.mxu0 0.0
    %1509 = vmatprep.subr.mxu0 0.0
    %1510 = vmatpush1.msra.mxu0 0.0
    %1511 = vmatprep.subr.mxu0 0.0
    %1512 = vmatpush1.msra.mxu0 0.0
    %1513 = vmatprep.subr.mxu0 0.0
    %1514 = vmatpush1.msra.mxu0 0.0
    %1515 = vmatprep.subr.mxu0 0.0
    %1516 = vmatpush1.msra.mxu0 0.0
    %1517 = vmatprep.subr.mxu0 0.0
    %1518 = vmatpush1.msra.mxu0 0.0
    %1519 = vmatprep.subr.mxu0 0.0
    %1520 = vmatpush1.msra.mxu0 0.0
    %1521 = vmatprep.subr.mxu0 0.0
    %1522 = vmatpush1.msra.mxu0 0.0
    %1523 = vmatprep.subr.mxu0 0.0
    %1524 = vmatpush1.msra.mxu0 0.0
    %1525 = vmatprep.subr.mxu0 0.0
    %1526 = vmatpush1.msra.mxu0 0.0
    %1527 = vmatprep.subr.mxu0 0.0
    %1528 = vmatpush1.msra.mxu0 0.0
    %1529 = vmatprep.subr.mxu0 0.0
    %1530 = vmatpush1.msra.mxu0 0.0
    %1531 = vmatprep.subr.mxu0 0.0
    %1532 = vmatpush1.msra.mxu0 0.0
    %1533 = vmatprep.subr.mxu0 0.0
    %1534 = vmatpush1.msra.mxu0 0.0
    %1535 = vmatprep.mubr.f32.mxu0 0.0
    %v1536 = vand.u32 %v90, 4294901760
    %v1537 = vsub.f32 %v90, %v1536
    %v1538 = vand.u32 %v1537, 4294901760
    %1539 = vmatmul.mubr.f32.gmra.mrb[0].mxu0 %v1538
    %v1540 = vpop.f32.mrb[0].mxu0
    %v1541 = vadd.f32 %v1459, %v1540
    %v1542 = vpop.f32.mrb[0].mxu0
    %v1543 = vadd.f32 %v1461, %v1542
    %1544 = vdwg.mxu0
    %v1545 = vand.u32 %v61, 4294901760
    %v1546 = vsub.f32 %v61, %v1545
    %v1547 = vand.u32 %v1546, 4294901760
    %1548 = vmatprep.subr.mxu0 %v1547
    %v1549 = vand.u32 %v60, 4294901760
    %v1550 = vsub.f32 %v60, %v1549
    %v1551 = vand.u32 %v1550, 4294901760
    %1552 = vmatpush1.msra.mxu0 %v1551
    %v1553 = vand.u32 %v69, 4294901760
    %v1554 = vsub.f32 %v69, %v1553
    %v1555 = vand.u32 %v1554, 4294901760
    %1556 = vmatprep.subr.mxu0 %v1555
    %v1557 = vand.u32 %v68, 4294901760
    %v1558 = vsub.f32 %v68, %v1557
    %v1559 = vand.u32 %v1558, 4294901760
    %1560 = vmatpush1.msra.mxu0 %v1559
    %v1561 = vand.u32 %v77, 4294901760
    %v1562 = vsub.f32 %v77, %v1561
    %v1563 = vand.u32 %v1562, 4294901760
    %1564 = vmatprep.subr.mxu0 %v1563
    %v1565 = vand.u32 %v76, 4294901760
    %v1566 = vsub.f32 %v76, %v1565
    %v1567 = vand.u32 %v1566, 4294901760
    %1568 = vmatpush1.msra.mxu0 %v1567
    %v1569 = vand.u32 %v85, 4294901760
    %v1570 = vsub.f32 %v85, %v1569
    %v1571 = vand.u32 %v1570, 4294901760
    %1572 = vmatprep.subr.mxu0 %v1571
    %v1573 = vand.u32 %v84, 4294901760
    %v1574 = vsub.f32 %v84, %v1573
    %v1575 = vand.u32 %v1574, 4294901760
    %1576 = vmatpush1.msra.mxu0 %v1575
    %1577 = vmatprep.subr.mxu0 0.0
    %1578 = vmatpush1.msra.mxu0 0.0
    %1579 = vmatprep.subr.mxu0 0.0
    %1580 = vmatpush1.msra.mxu0 0.0
    %1581 = vmatprep.subr.mxu0 0.0
    %1582 = vmatpush1.msra.mxu0 0.0
    %1583 = vmatprep.subr.mxu0 0.0
    %1584 = vmatpush1.msra.mxu0 0.0
    %1585 = vmatprep.subr.mxu0 0.0
    %1586 = vmatpush1.msra.mxu0 0.0
    %1587 = vmatprep.subr.mxu0 0.0
    %1588 = vmatpush1.msra.mxu0 0.0
    %1589 = vmatprep.subr.mxu0 0.0
    %1590 = vmatpush1.msra.mxu0 0.0
    %1591 = vmatprep.subr.mxu0 0.0
    %1592 = vmatpush1.msra.mxu0 0.0
    %1593 = vmatprep.subr.mxu0 0.0
    %1594 = vmatpush1.msra.mxu0 0.0
    %1595 = vmatprep.subr.mxu0 0.0
    %1596 = vmatpush1.msra.mxu0 0.0
    %1597 = vmatprep.subr.mxu0 0.0
    %1598 = vmatpush1.msra.mxu0 0.0
    %1599 = vmatprep.subr.mxu0 0.0
    %1600 = vmatpush1.msra.mxu0 0.0
    %1601 = vmatprep.subr.mxu0 0.0
    %1602 = vmatpush1.msra.mxu0 0.0
    %1603 = vmatprep.subr.mxu0 0.0
    %1604 = vmatpush1.msra.mxu0 0.0
    %1605 = vmatprep.subr.mxu0 0.0
    %1606 = vmatpush1.msra.mxu0 0.0
    %1607 = vmatprep.subr.mxu0 0.0
    %1608 = vmatpush1.msra.mxu0 0.0
    %1609 = vmatprep.subr.mxu0 0.0
    %1610 = vmatpush1.msra.mxu0 0.0
    %1611 = vmatprep.subr.mxu0 0.0
    %1612 = vmatpush1.msra.mxu0 0.0
    %1613 = vmatprep.subr.mxu0 0.0
    %1614 = vmatpush1.msra.mxu0 0.0
    %1615 = vmatprep.subr.mxu0 0.0
    %1616 = vmatpush1.msra.mxu0 0.0
    %1617 = vmatprep.subr.mxu0 0.0
    %1618 = vmatpush1.msra.mxu0 0.0
    %1619 = vmatprep.subr.mxu0 0.0
    %1620 = vmatpush1.msra.mxu0 0.0
    %1621 = vmatprep.subr.mxu0 0.0
    %1622 = vmatpush1.msra.mxu0 0.0
    %1623 = vmatprep.subr.mxu0 0.0
    %1624 = vmatpush1.msra.mxu0 0.0
    %1625 = vmatprep.subr.mxu0 0.0
    %1626 = vmatpush1.msra.mxu0 0.0
    %1627 = vmatprep.subr.mxu0 0.0
    %1628 = vmatpush1.msra.mxu0 0.0
    %1629 = vmatprep.subr.mxu0 0.0
    %1630 = vmatpush1.msra.mxu0 0.0
    %1631 = vmatprep.subr.mxu0 0.0
    %1632 = vmatpush1.msra.mxu0 0.0
    %1633 = vmatprep.mubr.f32.mxu0 0.0
    %v1634 = vand.u32 %v90, 4294901760
    %1635 = vmatmul.mubr.f32.gmra.mrb[0].mxu0 %v1634
    %v1636 = vpop.f32.mrb[0].mxu0
    %v1637 = vadd.f32 %v1541, %v1636
    %v1638 = vpop.f32.mrb[0].mxu0
    %v1639 = vadd.f32 %v1543, %v1638
    %1640 = vdwg.mxu0
    %v1641 = vand.u32 %v61, 4294901760
    %1642 = vmatprep.subr.mxu0 %v1641
    %v1643 = vand.u32 %v60, 4294901760
    %1644 = vmatpush1.msra.mxu0 %v1643
    %v1645 = vand.u32 %v69, 4294901760
    %1646 = vmatprep.subr.mxu0 %v1645
    %v1647 = vand.u32 %v68, 4294901760
    %1648 = vmatpush1.msra.mxu0 %v1647
    %v1649 = vand.u32 %v77, 4294901760
    %1650 = vmatprep.subr.mxu0 %v1649
    %v1651 = vand.u32 %v76, 4294901760
    %1652 = vmatpush1.msra.mxu0 %v1651
    %v1653 = vand.u32 %v85, 4294901760
    %1654 = vmatprep.subr.mxu0 %v1653
    %v1655 = vand.u32 %v84, 4294901760
    %1656 = vmatpush1.msra.mxu0 %v1655
    %1657 = vmatprep.subr.mxu0 0.0
    %1658 = vmatpush1.msra.mxu0 0.0
    %1659 = vmatprep.subr.mxu0 0.0
    %1660 = vmatpush1.msra.mxu0 0.0
    %1661 = vmatprep.subr.mxu0 0.0
    %1662 = vmatpush1.msra.mxu0 0.0
    %1663 = vmatprep.subr.mxu0 0.0
    %1664 = vmatpush1.msra.mxu0 0.0
    %1665 = vmatprep.subr.mxu0 0.0
    %1666 = vmatpush1.msra.mxu0 0.0
    %1667 = vmatprep.subr.mxu0 0.0
    %1668 = vmatpush1.msra.mxu0 0.0
    %1669 = vmatprep.subr.mxu0 0.0
    %1670 = vmatpush1.msra.mxu0 0.0
    %1671 = vmatprep.subr.mxu0 0.0
    %1672 = vmatpush1.msra.mxu0 0.0
    %1673 = vmatprep.subr.mxu0 0.0
    %1674 = vmatpush1.msra.mxu0 0.0
    %1675 = vmatprep.subr.mxu0 0.0
    %1676 = vmatpush1.msra.mxu0 0.0
    %1677 = vmatprep.subr.mxu0 0.0
    %1678 = vmatpush1.msra.mxu0 0.0
    %1679 = vmatprep.subr.mxu0 0.0
    %1680 = vmatpush1.msra.mxu0 0.0
    %1681 = vmatprep.subr.mxu0 0.0
    %1682 = vmatpush1.msra.mxu0 0.0
    %1683 = vmatprep.subr.mxu0 0.0
    %1684 = vmatpush1.msra.mxu0 0.0
    %1685 = vmatprep.subr.mxu0 0.0
    %1686 = vmatpush1.msra.mxu0 0.0
    %1687 = vmatprep.subr.mxu0 0.0
    %1688 = vmatpush1.msra.mxu0 0.0
    %1689 = vmatprep.subr.mxu0 0.0
    %1690 = vmatpush1.msra.mxu0 0.0
    %1691 = vmatprep.subr.mxu0 0.0
    %1692 = vmatpush1.msra.mxu0 0.0
    %1693 = vmatprep.subr.mxu0 0.0
    %1694 = vmatpush1.msra.mxu0 0.0
    %1695 = vmatprep.subr.mxu0 0.0
    %1696 = vmatpush1.msra.mxu0 0.0
    %1697 = vmatprep.subr.mxu0 0.0
    %1698 = vmatpush1.msra.mxu0 0.0
    %1699 = vmatprep.subr.mxu0 0.0
    %1700 = vmatpush1.msra.mxu0 0.0
    %1701 = vmatprep.subr.mxu0 0.0
    %1702 = vmatpush1.msra.mxu0 0.0
    %1703 = vmatprep.subr.mxu0 0.0
    %1704 = vmatpush1.msra.mxu0 0.0
    %1705 = vmatprep.subr.mxu0 0.0
    %1706 = vmatpush1.msra.mxu0 0.0
    %1707 = vmatprep.subr.mxu0 0.0
    %1708 = vmatpush1.msra.mxu0 0.0
    %1709 = vmatprep.subr.mxu0 0.0
    %1710 = vmatpush1.msra.mxu0 0.0
    %1711 = vmatprep.subr.mxu0 0.0
    %1712 = vmatpush1.msra.mxu0 0.0
    %1713 = vmatprep.mubr.f32.mxu0 0.0
    %v1714 = vand.u32 %v90, 4294901760
    %1715 = vmatmul.mubr.f32.gmra.mrb[0].mxu0 %v1714
    %v1716 = vpop.f32.mrb[0].mxu0
    %v1717 = vadd.f32 %v1637, %v1716
    %v1718 = vpop.f32.mrb[0].mxu0
    %v1719 = vadd.f32 %v1639, %v1718
    %1720 = vdwg.mxu0
    %v1721 = vand.u32 %v63, 4294901760
    %1722 = vmatprep.subr.mxu0 %v1721
    %v1723 = vand.u32 %v62, 4294901760
    %1724 = vmatpush1.msra.mxu0 %v1723
    %v1725 = vand.u32 %v71, 4294901760
    %1726 = vmatprep.subr.mxu0 %v1725
    %v1727 = vand.u32 %v70, 4294901760
    %1728 = vmatpush1.msra.mxu0 %v1727
    %v1729 = vand.u32 %v79, 4294901760
    %1730 = vmatprep.subr.mxu0 %v1729
    %v1731 = vand.u32 %v78, 4294901760
    %1732 = vmatpush1.msra.mxu0 %v1731
    %v1733 = vand.u32 %v87, 4294901760
    %1734 = vmatprep.subr.mxu0 %v1733
    %v1735 = vand.u32 %v86, 4294901760
    %1736 = vmatpush1.msra.mxu0 %v1735
    %1737 = vmatprep.subr.mxu0 0.0
    %1738 = vmatpush1.msra.mxu0 0.0
    %1739 = vmatprep.subr.mxu0 0.0
    %1740 = vmatpush1.msra.mxu0 0.0
    %1741 = vmatprep.subr.mxu0 0.0
    %1742 = vmatpush1.msra.mxu0 0.0
    %1743 = vmatprep.subr.mxu0 0.0
    %1744 = vmatpush1.msra.mxu0 0.0
    %1745 = vmatprep.subr.mxu0 0.0
    %1746 = vmatpush1.msra.mxu0 0.0
    %1747 = vmatprep.subr.mxu0 0.0
    %1748 = vmatpush1.msra.mxu0 0.0
    %1749 = vmatprep.subr.mxu0 0.0
    %1750 = vmatpush1.msra.mxu0 0.0
    %1751 = vmatprep.subr.mxu0 0.0
    %1752 = vmatpush1.msra.mxu0 0.0
    %1753 = vmatprep.subr.mxu0 0.0
    %1754 = vmatpush1.msra.mxu0 0.0
    %1755 = vmatprep.subr.mxu0 0.0
    %1756 = vmatpush1.msra.mxu0 0.0
    %1757 = vmatprep.subr.mxu0 0.0
    %1758 = vmatpush1.msra.mxu0 0.0
    %1759 = vmatprep.subr.mxu0 0.0
    %1760 = vmatpush1.msra.mxu0 0.0
    %1761 = vmatprep.subr.mxu0 0.0
    %1762 = vmatpush1.msra.mxu0 0.0
    %1763 = vmatprep.subr.mxu0 0.0
    %1764 = vmatpush1.msra.mxu0 0.0
    %1765 = vmatprep.subr.mxu0 0.0
    %1766 = vmatpush1.msra.mxu0 0.0
    %1767 = vmatprep.subr.mxu0 0.0
    %1768 = vmatpush1.msra.mxu0 0.0
    %1769 = vmatprep.subr.mxu0 0.0
    %1770 = vmatpush1.msra.mxu0 0.0
    %1771 = vmatprep.subr.mxu0 0.0
    %1772 = vmatpush1.msra.mxu0 0.0
    %1773 = vmatprep.subr.mxu0 0.0
    %1774 = vmatpush1.msra.mxu0 0.0
    %1775 = vmatprep.subr.mxu0 0.0
    %1776 = vmatpush1.msra.mxu0 0.0
    %1777 = vmatprep.subr.mxu0 0.0
    %1778 = vmatpush1.msra.mxu0 0.0
    %1779 = vmatprep.subr.mxu0 0.0
    %1780 = vmatpush1.msra.mxu0 0.0
    %1781 = vmatprep.subr.mxu0 0.0
    %1782 = vmatpush1.msra.mxu0 0.0
    %1783 = vmatprep.subr.mxu0 0.0
    %1784 = vmatpush1.msra.mxu0 0.0
    %1785 = vmatprep.subr.mxu0 0.0
    %1786 = vmatpush1.msra.mxu0 0.0
    %1787 = vmatprep.subr.mxu0 0.0
    %1788 = vmatpush1.msra.mxu0 0.0
    %1789 = vmatprep.subr.mxu0 0.0
    %1790 = vmatpush1.msra.mxu0 0.0
    %1791 = vmatprep.subr.mxu0 0.0
    %1792 = vmatpush1.msra.mxu0 0.0
    %1793 = vmatprep.mubr.f32.mxu0 0.0
    %v1794 = vand.u32 %v90, 4294901760
    %v1795 = vsub.f32 %v90, %v1794
    %v1796 = vand.u32 %v1795, 4294901760
    %v1797 = vsub.f32 %v1795, %v1796
    %v1798 = vand.u32 %v1797, 4294901760
    %1799 = vmatmul.mubr.f32.gmra.mrb[0].mxu0 %v1798
    %v1800 = vpop.f32.mrb[0].mxu0
    %v1801 = vadd.f32 0.0, %v1800
    %v1802 = vpop.f32.mrb[0].mxu0
    %v1803 = vadd.f32 0.0, %v1802
    %1804 = vdwg.mxu0
    %v1805 = vand.u32 %v63, 4294901760
    %v1806 = vsub.f32 %v63, %v1805
    %v1807 = vand.u32 %v1806, 4294901760
    %v1808 = vsub.f32 %v1806, %v1807
    %v1809 = vand.u32 %v1808, 4294901760
    %1810 = vmatprep.subr.mxu0 %v1809
    %v1811 = vand.u32 %v62, 4294901760
    %v1812 = vsub.f32 %v62, %v1811
    %v1813 = vand.u32 %v1812, 4294901760
    %v1814 = vsub.f32 %v1812, %v1813
    %v1815 = vand.u32 %v1814, 4294901760
    %1816 = vmatpush1.msra.mxu0 %v1815
    %v1817 = vand.u32 %v71, 4294901760
    %v1818 = vsub.f32 %v71, %v1817
    %v1819 = vand.u32 %v1818, 4294901760
    %v1820 = vsub.f32 %v1818, %v1819
    %v1821 = vand.u32 %v1820, 4294901760
    %1822 = vmatprep.subr.mxu0 %v1821
    %v1823 = vand.u32 %v70, 4294901760
    %v1824 = vsub.f32 %v70, %v1823
    %v1825 = vand.u32 %v1824, 4294901760
    %v1826 = vsub.f32 %v1824, %v1825
    %v1827 = vand.u32 %v1826, 4294901760
    %1828 = vmatpush1.msra.mxu0 %v1827
    %v1829 = vand.u32 %v79, 4294901760
    %v1830 = vsub.f32 %v79, %v1829
    %v1831 = vand.u32 %v1830, 4294901760
    %v1832 = vsub.f32 %v1830, %v1831
    %v1833 = vand.u32 %v1832, 4294901760
    %1834 = vmatprep.subr.mxu0 %v1833
    %v1835 = vand.u32 %v78, 4294901760
    %v1836 = vsub.f32 %v78, %v1835
    %v1837 = vand.u32 %v1836, 4294901760
    %v1838 = vsub.f32 %v1836, %v1837
    %v1839 = vand.u32 %v1838, 4294901760
    %1840 = vmatpush1.msra.mxu0 %v1839
    %v1841 = vand.u32 %v87, 4294901760
    %v1842 = vsub.f32 %v87, %v1841
    %v1843 = vand.u32 %v1842, 4294901760
    %v1844 = vsub.f32 %v1842, %v1843
    %v1845 = vand.u32 %v1844, 4294901760
    %1846 = vmatprep.subr.mxu0 %v1845
    %v1847 = vand.u32 %v86, 4294901760
    %v1848 = vsub.f32 %v86, %v1847
    %v1849 = vand.u32 %v1848, 4294901760
    %v1850 = vsub.f32 %v1848, %v1849
    %v1851 = vand.u32 %v1850, 4294901760
    %1852 = vmatpush1.msra.mxu0 %v1851
    %1853 = vmatprep.subr.mxu0 0.0
    %1854 = vmatpush1.msra.mxu0 0.0
    %1855 = vmatprep.subr.mxu0 0.0
    %1856 = vmatpush1.msra.mxu0 0.0
    %1857 = vmatprep.subr.mxu0 0.0
    %1858 = vmatpush1.msra.mxu0 0.0
    %1859 = vmatprep.subr.mxu0 0.0
    %1860 = vmatpush1.msra.mxu0 0.0
    %1861 = vmatprep.subr.mxu0 0.0
    %1862 = vmatpush1.msra.mxu0 0.0
    %1863 = vmatprep.subr.mxu0 0.0
    %1864 = vmatpush1.msra.mxu0 0.0
    %1865 = vmatprep.subr.mxu0 0.0
    %1866 = vmatpush1.msra.mxu0 0.0
    %1867 = vmatprep.subr.mxu0 0.0
    %1868 = vmatpush1.msra.mxu0 0.0
    %1869 = vmatprep.subr.mxu0 0.0
    %1870 = vmatpush1.msra.mxu0 0.0
    %1871 = vmatprep.subr.mxu0 0.0
    %1872 = vmatpush1.msra.mxu0 0.0
    %1873 = vmatprep.subr.mxu0 0.0
    %1874 = vmatpush1.msra.mxu0 0.0
    %1875 = vmatprep.subr.mxu0 0.0
    %1876 = vmatpush1.msra.mxu0 0.0
    %1877 = vmatprep.subr.mxu0 0.0
    %1878 = vmatpush1.msra.mxu0 0.0
    %1879 = vmatprep.subr.mxu0 0.0
    %1880 = vmatpush1.msra.mxu0 0.0
    %1881 = vmatprep.subr.mxu0 0.0
    %1882 = vmatpush1.msra.mxu0 0.0
    %1883 = vmatprep.subr.mxu0 0.0
    %1884 = vmatpush1.msra.mxu0 0.0
    %1885 = vmatprep.subr.mxu0 0.0
    %1886 = vmatpush1.msra.mxu0 0.0
    %1887 = vmatprep.subr.mxu0 0.0
    %1888 = vmatpush1.msra.mxu0 0.0
    %1889 = vmatprep.subr.mxu0 0.0
    %1890 = vmatpush1.msra.mxu0 0.0
    %1891 = vmatprep.subr.mxu0 0.0
    %1892 = vmatpush1.msra.mxu0 0.0
    %1893 = vmatprep.subr.mxu0 0.0
    %1894 = vmatpush1.msra.mxu0 0.0
    %1895 = vmatprep.subr.mxu0 0.0
    %1896 = vmatpush1.msra.mxu0 0.0
    %1897 = vmatprep.subr.mxu0 0.0
    %1898 = vmatpush1.msra.mxu0 0.0
    %1899 = vmatprep.subr.mxu0 0.0
    %1900 = vmatpush1.msra.mxu0 0.0
    %1901 = vmatprep.subr.mxu0 0.0
    %1902 = vmatpush1.msra.mxu0 0.0
    %1903 = vmatprep.subr.mxu0 0.0
    %1904 = vmatpush1.msra.mxu0 0.0
    %1905 = vmatprep.subr.mxu0 0.0
    %1906 = vmatpush1.msra.mxu0 0.0
    %1907 = vmatprep.subr.mxu0 0.0
    %1908 = vmatpush1.msra.mxu0 0.0
    %1909 = vmatprep.mubr.f32.mxu0 0.0
    %v1910 = vand.u32 %v90, 4294901760
    %1911 = vmatmul.mubr.f32.gmra.mrb[0].mxu0 %v1910
    %v1912 = vpop.f32.mrb[0].mxu0
    %v1913 = vadd.f32 %v1801, %v1912
    %v1914 = vpop.f32.mrb[0].mxu0
    %v1915 = vadd.f32 %v1803, %v1914
    %1916 = vdwg.mxu0
    %v1917 = vand.u32 %v63, 4294901760
    %v1918 = vsub.f32 %v63, %v1917
    %1919 = vmatprep.subr.mxu0 %v1918
    %v1920 = vand.u32 %v62, 4294901760
    %v1921 = vsub.f32 %v62, %v1920
    %1922 = vmatpush1.msra.mxu0 %v1921
    %v1923 = vand.u32 %v71, 4294901760
    %v1924 = vsub.f32 %v71, %v1923
    %1925 = vmatprep.subr.mxu0 %v1924
    %v1926 = vand.u32 %v70, 4294901760
    %v1927 = vsub.f32 %v70, %v1926
    %1928 = vmatpush1.msra.mxu0 %v1927
    %v1929 = vand.u32 %v79, 4294901760
    %v1930 = vsub.f32 %v79, %v1929
    %1931 = vmatprep.subr.mxu0 %v1930
    %v1932 = vand.u32 %v78, 4294901760
    %v1933 = vsub.f32 %v78, %v1932
    %1934 = vmatpush1.msra.mxu0 %v1933
    %v1935 = vand.u32 %v87, 4294901760
    %v1936 = vsub.f32 %v87, %v1935
    %1937 = vmatprep.subr.mxu0 %v1936
    %v1938 = vand.u32 %v86, 4294901760
    %v1939 = vsub.f32 %v86, %v1938
    %1940 = vmatpush1.msra.mxu0 %v1939
    %1941 = vmatprep.subr.mxu0 0.0
    %1942 = vmatpush1.msra.mxu0 0.0
    %1943 = vmatprep.subr.mxu0 0.0
    %1944 = vmatpush1.msra.mxu0 0.0
    %1945 = vmatprep.subr.mxu0 0.0
    %1946 = vmatpush1.msra.mxu0 0.0
    %1947 = vmatprep.subr.mxu0 0.0
    %1948 = vmatpush1.msra.mxu0 0.0
    %1949 = vmatprep.subr.mxu0 0.0
    %1950 = vmatpush1.msra.mxu0 0.0
    %1951 = vmatprep.subr.mxu0 0.0
    %1952 = vmatpush1.msra.mxu0 0.0
    %1953 = vmatprep.subr.mxu0 0.0
    %1954 = vmatpush1.msra.mxu0 0.0
    %1955 = vmatprep.subr.mxu0 0.0
    %1956 = vmatpush1.msra.mxu0 0.0
    %1957 = vmatprep.subr.mxu0 0.0
    %1958 = vmatpush1.msra.mxu0 0.0
    %1959 = vmatprep.subr.mxu0 0.0
    %1960 = vmatpush1.msra.mxu0 0.0
    %1961 = vmatprep.subr.mxu0 0.0
    %1962 = vmatpush1.msra.mxu0 0.0
    %1963 = vmatprep.subr.mxu0 0.0
    %1964 = vmatpush1.msra.mxu0 0.0
    %1965 = vmatprep.subr.mxu0 0.0
    %1966 = vmatpush1.msra.mxu0 0.0
    %1967 = vmatprep.subr.mxu0 0.0
    %1968 = vmatpush1.msra.mxu0 0.0
    %1969 = vmatprep.subr.mxu0 0.0
    %1970 = vmatpush1.msra.mxu0 0.0
    %1971 = vmatprep.subr.mxu0 0.0
    %1972 = vmatpush1.msra.mxu0 0.0
    %1973 = vmatprep.subr.mxu0 0.0
    %1974 = vmatpush1.msra.mxu0 0.0
    %1975 = vmatprep.subr.mxu0 0.0
    %1976 = vmatpush1.msra.mxu0 0.0
    %1977 = vmatprep.subr.mxu0 0.0
    %1978 = vmatpush1.msra.mxu0 0.0
    %1979 = vmatprep.subr.mxu0 0.0
    %1980 = vmatpush1.msra.mxu0 0.0
    %1981 = vmatprep.subr.mxu0 0.0
    %1982 = vmatpush1.msra.mxu0 0.0
    %1983 = vmatprep.subr.mxu0 0.0
    %1984 = vmatpush1.msra.mxu0 0.0
    %1985 = vmatprep.subr.mxu0 0.0
    %1986 = vmatpush1.msra.mxu0 0.0
    %1987 = vmatprep.subr.mxu0 0.0
    %1988 = vmatpush1.msra.mxu0 0.0
    %1989 = vmatprep.subr.mxu0 0.0
    %1990 = vmatpush1.msra.mxu0 0.0
    %1991 = vmatprep.subr.mxu0 0.0
    %1992 = vmatpush1.msra.mxu0 0.0
    %1993 = vmatprep.subr.mxu0 0.0
    %1994 = vmatpush1.msra.mxu0 0.0
    %1995 = vmatprep.subr.mxu0 0.0
    %1996 = vmatpush1.msra.mxu0 0.0
    %1997 = vmatprep.mubr.f32.mxu0 0.0
    %v1998 = vand.u32 %v90, 4294901760
    %v1999 = vsub.f32 %v90, %v1998
    %2000 = vmatmul.mubr.f32.gmra.mrb[0].mxu0 %v1999
    %v2001 = vpop.f32.mrb[0].mxu0
    %v2002 = vadd.f32 %v1913, %v2001
    %v2003 = vpop.f32.mrb[0].mxu0
    %v2004 = vadd.f32 %v1915, %v2003
    %2005 = vdwg.mxu0
    %v2006 = vand.u32 %v63, 4294901760
    %2007 = vmatprep.subr.mxu0 %v2006
    %v2008 = vand.u32 %v62, 4294901760
    %2009 = vmatpush1.msra.mxu0 %v2008
    %v2010 = vand.u32 %v71, 4294901760
    %2011 = vmatprep.subr.mxu0 %v2010
    %v2012 = vand.u32 %v70, 4294901760
    %2013 = vmatpush1.msra.mxu0 %v2012
    %v2014 = vand.u32 %v79, 4294901760
    %2015 = vmatprep.subr.mxu0 %v2014
    %v2016 = vand.u32 %v78, 4294901760
    %2017 = vmatpush1.msra.mxu0 %v2016
    %v2018 = vand.u32 %v87, 4294901760
    %2019 = vmatprep.subr.mxu0 %v2018
    %v2020 = vand.u32 %v86, 4294901760
    %2021 = vmatpush1.msra.mxu0 %v2020
    %2022 = vmatprep.subr.mxu0 0.0
    %2023 = vmatpush1.msra.mxu0 0.0
    %2024 = vmatprep.subr.mxu0 0.0
    %2025 = vmatpush1.msra.mxu0 0.0
    %2026 = vmatprep.subr.mxu0 0.0
    %2027 = vmatpush1.msra.mxu0 0.0
    %2028 = vmatprep.subr.mxu0 0.0
    %2029 = vmatpush1.msra.mxu0 0.0
    %2030 = vmatprep.subr.mxu0 0.0
    %2031 = vmatpush1.msra.mxu0 0.0
    %2032 = vmatprep.subr.mxu0 0.0
    %2033 = vmatpush1.msra.mxu0 0.0
    %2034 = vmatprep.subr.mxu0 0.0
    %2035 = vmatpush1.msra.mxu0 0.0
    %2036 = vmatprep.subr.mxu0 0.0
    %2037 = vmatpush1.msra.mxu0 0.0
    %2038 = vmatprep.subr.mxu0 0.0
    %2039 = vmatpush1.msra.mxu0 0.0
    %2040 = vmatprep.subr.mxu0 0.0
    %2041 = vmatpush1.msra.mxu0 0.0
    %2042 = vmatprep.subr.mxu0 0.0
    %2043 = vmatpush1.msra.mxu0 0.0
    %2044 = vmatprep.subr.mxu0 0.0
    %2045 = vmatpush1.msra.mxu0 0.0
    %2046 = vmatprep.subr.mxu0 0.0
    %2047 = vmatpush1.msra.mxu0 0.0
    %2048 = vmatprep.subr.mxu0 0.0
    %2049 = vmatpush1.msra.mxu0 0.0
    %2050 = vmatprep.subr.mxu0 0.0
    %2051 = vmatpush1.msra.mxu0 0.0
    %2052 = vmatprep.subr.mxu0 0.0
    %2053 = vmatpush1.msra.mxu0 0.0
    %2054 = vmatprep.subr.mxu0 0.0
    %2055 = vmatpush1.msra.mxu0 0.0
    %2056 = vmatprep.subr.mxu0 0.0
    %2057 = vmatpush1.msra.mxu0 0.0
    %2058 = vmatprep.subr.mxu0 0.0
    %2059 = vmatpush1.msra.mxu0 0.0
    %2060 = vmatprep.subr.mxu0 0.0
    %2061 = vmatpush1.msra.mxu0 0.0
    %2062 = vmatprep.subr.mxu0 0.0
    %2063 = vmatpush1.msra.mxu0 0.0
    %2064 = vmatprep.subr.mxu0 0.0
    %2065 = vmatpush1.msra.mxu0 0.0
    %2066 = vmatprep.subr.mxu0 0.0
    %2067 = vmatpush1.msra.mxu0 0.0
    %2068 = vmatprep.subr.mxu0 0.0
    %2069 = vmatpush1.msra.mxu0 0.0
    %2070 = vmatprep.subr.mxu0 0.0
    %2071 = vmatpush1.msra.mxu0 0.0
    %2072 = vmatprep.subr.mxu0 0.0
    %2073 = vmatpush1.msra.mxu0 0.0
    %2074 = vmatprep.subr.mxu0 0.0
    %2075 = vmatpush1.msra.mxu0 0.0
    %2076 = vmatprep.subr.mxu0 0.0
    %2077 = vmatpush1.msra.mxu0 0.0
    %2078 = vmatprep.mubr.f32.mxu0 0.0
    %v2079 = vand.u32 %v90, 4294901760
    %v2080 = vsub.f32 %v90, %v2079
    %v2081 = vand.u32 %v2080, 4294901760
    %2082 = vmatmul.mubr.f32.gmra.mrb[0].mxu0 %v2081
    %v2083 = vpop.f32.mrb[0].mxu0
    %v2084 = vadd.f32 %v2002, %v2083
    %v2085 = vpop.f32.mrb[0].mxu0
    %v2086 = vadd.f32 %v2004, %v2085
    %2087 = vdwg.mxu0
    %v2088 = vand.u32 %v63, 4294901760
    %v2089 = vsub.f32 %v63, %v2088
    %v2090 = vand.u32 %v2089, 4294901760
    %2091 = vmatprep.subr.mxu0 %v2090
    %v2092 = vand.u32 %v62, 4294901760
    %v2093 = vsub.f32 %v62, %v2092
    %v2094 = vand.u32 %v2093, 4294901760
    %2095 = vmatpush1.msra.mxu0 %v2094
    %v2096 = vand.u32 %v71, 4294901760
    %v2097 = vsub.f32 %v71, %v2096
    %v2098 = vand.u32 %v2097, 4294901760
    %2099 = vmatprep.subr.mxu0 %v2098
    %v2100 = vand.u32 %v70, 4294901760
    %v2101 = vsub.f32 %v70, %v2100
    %v2102 = vand.u32 %v2101, 4294901760
    %2103 = vmatpush1.msra.mxu0 %v2102
    %v2104 = vand.u32 %v79, 4294901760
    %v2105 = vsub.f32 %v79, %v2104
    %v2106 = vand.u32 %v2105, 4294901760
    %2107 = vmatprep.subr.mxu0 %v2106
    %v2108 = vand.u32 %v78, 4294901760
    %v2109 = vsub.f32 %v78, %v2108
    %v2110 = vand.u32 %v2109, 4294901760
    %2111 = vmatpush1.msra.mxu0 %v2110
    %v2112 = vand.u32 %v87, 4294901760
    %v2113 = vsub.f32 %v87, %v2112
    %v2114 = vand.u32 %v2113, 4294901760
    %2115 = vmatprep.subr.mxu0 %v2114
    %v2116 = vand.u32 %v86, 4294901760
    %v2117 = vsub.f32 %v86, %v2116
    %v2118 = vand.u32 %v2117, 4294901760
    %2119 = vmatpush1.msra.mxu0 %v2118
    %2120 = vmatprep.subr.mxu0 0.0
    %2121 = vmatpush1.msra.mxu0 0.0
    %2122 = vmatprep.subr.mxu0 0.0
    %2123 = vmatpush1.msra.mxu0 0.0
    %2124 = vmatprep.subr.mxu0 0.0
    %2125 = vmatpush1.msra.mxu0 0.0
    %2126 = vmatprep.subr.mxu0 0.0
    %2127 = vmatpush1.msra.mxu0 0.0
    %2128 = vmatprep.subr.mxu0 0.0
    %2129 = vmatpush1.msra.mxu0 0.0
    %2130 = vmatprep.subr.mxu0 0.0
    %2131 = vmatpush1.msra.mxu0 0.0
    %2132 = vmatprep.subr.mxu0 0.0
    %2133 = vmatpush1.msra.mxu0 0.0
    %2134 = vmatprep.subr.mxu0 0.0
    %2135 = vmatpush1.msra.mxu0 0.0
    %2136 = vmatprep.subr.mxu0 0.0
    %2137 = vmatpush1.msra.mxu0 0.0
    %2138 = vmatprep.subr.mxu0 0.0
    %2139 = vmatpush1.msra.mxu0 0.0
    %2140 = vmatprep.subr.mxu0 0.0
    %2141 = vmatpush1.msra.mxu0 0.0
    %2142 = vmatprep.subr.mxu0 0.0
    %2143 = vmatpush1.msra.mxu0 0.0
    %2144 = vmatprep.subr.mxu0 0.0
    %2145 = vmatpush1.msra.mxu0 0.0
    %2146 = vmatprep.subr.mxu0 0.0
    %2147 = vmatpush1.msra.mxu0 0.0
    %2148 = vmatprep.subr.mxu0 0.0
    %2149 = vmatpush1.msra.mxu0 0.0
    %2150 = vmatprep.subr.mxu0 0.0
    %2151 = vmatpush1.msra.mxu0 0.0
    %2152 = vmatprep.subr.mxu0 0.0
    %2153 = vmatpush1.msra.mxu0 0.0
    %2154 = vmatprep.subr.mxu0 0.0
    %2155 = vmatpush1.msra.mxu0 0.0
    %2156 = vmatprep.subr.mxu0 0.0
    %2157 = vmatpush1.msra.mxu0 0.0
    %2158 = vmatprep.subr.mxu0 0.0
    %2159 = vmatpush1.msra.mxu0 0.0
    %2160 = vmatprep.subr.mxu0 0.0
    %2161 = vmatpush1.msra.mxu0 0.0
    %2162 = vmatprep.subr.mxu0 0.0
    %2163 = vmatpush1.msra.mxu0 0.0
    %2164 = vmatprep.subr.mxu0 0.0
    %2165 = vmatpush1.msra.mxu0 0.0
    %2166 = vmatprep.subr.mxu0 0.0
    %2167 = vmatpush1.msra.mxu0 0.0
    %2168 = vmatprep.subr.mxu0 0.0
    %2169 = vmatpush1.msra.mxu0 0.0
    %2170 = vmatprep.subr.mxu0 0.0
    %2171 = vmatpush1.msra.mxu0 0.0
    %2172 = vmatprep.subr.mxu0 0.0
    %2173 = vmatpush1.msra.mxu0 0.0
    %2174 = vmatprep.subr.mxu0 0.0
    %2175 = vmatpush1.msra.mxu0 0.0
    %2176 = vmatprep.mubr.f32.mxu0 0.0
    %v2177 = vand.u32 %v90, 4294901760
    %2178 = vmatmul.mubr.f32.gmra.mrb[0].mxu0 %v2177
    %v2179 = vpop.f32.mrb[0].mxu0
    %v2180 = vadd.f32 %v2084, %v2179
    %v2181 = vpop.f32.mrb[0].mxu0
    %v2182 = vadd.f32 %v2086, %v2181
    %2183 = vdwg.mxu0
    %v2184 = vand.u32 %v63, 4294901760
    %2185 = vmatprep.subr.mxu0 %v2184
    %v2186 = vand.u32 %v62, 4294901760
    %2187 = vmatpush1.msra.mxu0 %v2186
    %v2188 = vand.u32 %v71, 4294901760
    %2189 = vmatprep.subr.mxu0 %v2188
    %v2190 = vand.u32 %v70, 4294901760
    %2191 = vmatpush1.msra.mxu0 %v2190
    %v2192 = vand.u32 %v79, 4294901760
    %2193 = vmatprep.subr.mxu0 %v2192
    %v2194 = vand.u32 %v78, 4294901760
    %2195 = vmatpush1.msra.mxu0 %v2194
    %v2196 = vand.u32 %v87, 4294901760
    %2197 = vmatprep.subr.mxu0 %v2196
    %v2198 = vand.u32 %v86, 4294901760
    %2199 = vmatpush1.msra.mxu0 %v2198
    %2200 = vmatprep.subr.mxu0 0.0
    %2201 = vmatpush1.msra.mxu0 0.0
    %2202 = vmatprep.subr.mxu0 0.0
    %2203 = vmatpush1.msra.mxu0 0.0
    %2204 = vmatprep.subr.mxu0 0.0
    %2205 = vmatpush1.msra.mxu0 0.0
    %2206 = vmatprep.subr.mxu0 0.0
    %2207 = vmatpush1.msra.mxu0 0.0
    %2208 = vmatprep.subr.mxu0 0.0
    %2209 = vmatpush1.msra.mxu0 0.0
    %2210 = vmatprep.subr.mxu0 0.0
    %2211 = vmatpush1.msra.mxu0 0.0
    %2212 = vmatprep.subr.mxu0 0.0
    %2213 = vmatpush1.msra.mxu0 0.0
    %2214 = vmatprep.subr.mxu0 0.0
    %2215 = vmatpush1.msra.mxu0 0.0
    %2216 = vmatprep.subr.mxu0 0.0
    %2217 = vmatpush1.msra.mxu0 0.0
    %2218 = vmatprep.subr.mxu0 0.0
    %2219 = vmatpush1.msra.mxu0 0.0
    %2220 = vmatprep.subr.mxu0 0.0
    %2221 = vmatpush1.msra.mxu0 0.0
    %2222 = vmatprep.subr.mxu0 0.0
    %2223 = vmatpush1.msra.mxu0 0.0
    %2224 = vmatprep.subr.mxu0 0.0
    %2225 = vmatpush1.msra.mxu0 0.0
    %2226 = vmatprep.subr.mxu0 0.0
    %2227 = vmatpush1.msra.mxu0 0.0
    %2228 = vmatprep.subr.mxu0 0.0
    %2229 = vmatpush1.msra.mxu0 0.0
    %2230 = vmatprep.subr.mxu0 0.0
    %2231 = vmatpush1.msra.mxu0 0.0
    %2232 = vmatprep.subr.mxu0 0.0
    %2233 = vmatpush1.msra.mxu0 0.0
    %2234 = vmatprep.subr.mxu0 0.0
    %2235 = vmatpush1.msra.mxu0 0.0
    %2236 = vmatprep.subr.mxu0 0.0
    %2237 = vmatpush1.msra.mxu0 0.0
    %2238 = vmatprep.subr.mxu0 0.0
    %2239 = vmatpush1.msra.mxu0 0.0
    %2240 = vmatprep.subr.mxu0 0.0
    %2241 = vmatpush1.msra.mxu0 0.0
    %2242 = vmatprep.subr.mxu0 0.0
    %2243 = vmatpush1.msra.mxu0 0.0
    %2244 = vmatprep.subr.mxu0 0.0
    %2245 = vmatpush1.msra.mxu0 0.0
    %2246 = vmatprep.subr.mxu0 0.0
    %2247 = vmatpush1.msra.mxu0 0.0
    %2248 = vmatprep.subr.mxu0 0.0
    %2249 = vmatpush1.msra.mxu0 0.0
    %2250 = vmatprep.subr.mxu0 0.0
    %2251 = vmatpush1.msra.mxu0 0.0
    %2252 = vmatprep.subr.mxu0 0.0
    %2253 = vmatpush1.msra.mxu0 0.0
    %2254 = vmatprep.subr.mxu0 0.0
    %2255 = vmatpush1.msra.mxu0 0.0
    %2256 = vmatprep.mubr.f32.mxu0 0.0
    %v2257 = vand.u32 %v90, 4294901760
    %2258 = vmatmul.mubr.f32.gmra.mrb[0].mxu0 %v2257
    %v2259 = vpop.f32.mrb[0].mxu0
    %v2260 = vadd.f32 %v2180, %v2259
    %v2261 = vpop.f32.mrb[0].mxu0
    %v2262 = vadd.f32 %v2182, %v2261
    %2263 = vdwg.mxu0
    %v2264 = vld [vmem:[#allocation7] sm:$0xff]
    %v2266 = vlaneseq
    %v2267 = vshrl.u32 %v2266, 7
    %v2268 = vsub.s32 0, %v2267
    %v2269 = vrot.slane %v2264, %v2268
    %v2270 = vlaneseq
    %v2271 = vshrl.u32 %v2270, 7
    %v2272 = vsub.s32 1, %v2271
    %v2273 = vrot.slane %v2264, %v2272
    %v2274 = vlaneseq
    %v2275 = vshrl.u32 %v2274, 7
    %v2276 = vsub.s32 2, %v2275
    %v2277 = vrot.slane %v2264, %v2276
    %v2278 = vlaneseq
    %v2279 = vshrl.u32 %v2278, 7
    %v2280 = vsub.s32 3, %v2279
    %v2281 = vrot.slane %v2264, %v2280
    %v2282 = vlaneseq
    %v2283 = vshrl.u32 %v2282, 7
    %v2284 = vsub.s32 4, %v2283
    %v2285 = vrot.slane %v2264, %v2284
    %v2286 = vlaneseq
    %v2287 = vshrl.u32 %v2286, 7
    %v2288 = vsub.s32 5, %v2287
    %v2289 = vrot.slane %v2264, %v2288
    %v2290 = vlaneseq
    %v2291 = vshrl.u32 %v2290, 7
    %v2292 = vsub.s32 6, %v2291
    %v2293 = vrot.slane %v2264, %v2292
    %v2294 = vlaneseq
    %v2295 = vshrl.u32 %v2294, 7
    %v2296 = vsub.s32 7, %v2295
    %v2297 = vrot.slane %v2264, %v2296
    %v2306 = vmul.f32 %v631, %v2269
    %v2307 = vmul.f32 %v633, %v2273
    %v2308 = vmul.f32 %v1174, %v2277
    %v2309 = vmul.f32 %v1176, %v2281
    %v2310 = vmul.f32 %v1717, %v2285
    %v2311 = vmul.f32 %v1719, %v2289
    %v2312 = vmul.f32 %v2260, %v2293
    %v2313 = vmul.f32 %v2262, %v2297
    %v2314 = vld [vmem:[%s3] sm:$0xff]
    %v2316 = vlaneseq
    %v2317 = vshrl.u32 %v2316, 7
    %v2318 = vsub.s32 0, %v2317
    %v2319 = vrot.slane %v2314, %v2318
    %v2320 = vlaneseq
    %v2321 = vshrl.u32 %v2320, 7
    %v2322 = vsub.s32 1, %v2321
    %v2323 = vrot.slane %v2314, %v2322
    %v2324 = vlaneseq
    %v2325 = vshrl.u32 %v2324, 7
    %v2326 = vsub.s32 2, %v2325
    %v2327 = vrot.slane %v2314, %v2326
    %v2328 = vlaneseq
    %v2329 = vshrl.u32 %v2328, 7
    %v2330 = vsub.s32 3, %v2329
    %v2331 = vrot.slane %v2314, %v2330
    %v2332 = vlaneseq
    %v2333 = vshrl.u32 %v2332, 7
    %v2334 = vsub.s32 4, %v2333
    %v2335 = vrot.slane %v2314, %v2334
    %v2336 = vlaneseq
    %v2337 = vshrl.u32 %v2336, 7
    %v2338 = vsub.s32 5, %v2337
    %v2339 = vrot.slane %v2314, %v2338
    %v2340 = vlaneseq
    %v2341 = vshrl.u32 %v2340, 7
    %v2342 = vsub.s32 6, %v2341
    %v2343 = vrot.slane %v2314, %v2342
    %v2344 = vlaneseq
    %v2345 = vshrl.u32 %v2344, 7
    %v2346 = vsub.s32 7, %v2345
    %v2347 = vrot.slane %v2314, %v2346
    %v2356 = vadd.f32 %v2306, %v2319
    %v2357 = vadd.f32 %v2307, %v2323
    %v2358 = vadd.f32 %v2308, %v2327
    %v2359 = vadd.f32 %v2309, %v2331
    %v2360 = vadd.f32 %v2310, %v2335
    %v2361 = vadd.f32 %v2311, %v2339
    %v2362 = vadd.f32 %v2312, %v2343
    %v2363 = vadd.f32 %v2313, %v2347
    %v2364 = vand.u32 2147483647, %v2356
    %vm2365 = vcmp.le.f32.partialorder %v2364, 0.7853982
    %vm2366 = vcmp.lt.s32.totalorder %v2356, 0
    %v2367 = vand.u32 %v2356, 2139095040
    %v2368 = vshrl.u32 %v2367, 23
    %v2369 = vsub.s32 %v2368, 127
    %v2370 = vand.u32 2147483647, %v2356
    %v2371 = vand.u32 %v2370, 8388607
    %v2372 = vor.u32 %v2371, 8388608
    %v2373 = vsub.s32 0, %v2372
    %v2374 = vadd.s32 %v2369, 1
    %vm2375 = vcmp.gt.s32.totalorder %v2374, 0
    %v2376 = vsel %vm2375, %v2374, 0
    %v2377 = vshrl.u32 %v2376, 5
    %v2378 = vand.u32 %v2376, 31
    %v2379 = vsub.s32 32, %v2378
    %v2380 = vshrl.u32 683565275, %v2379
    %v2381 = vshll.u32 683565275, %v2378
    %v2382 = vshrl.u32 2475754826, %v2379
    %v2383 = vor.u32 %v2381, %v2382
    %v2384 = vshll.u32 2475754826, %v2378
    %v2385 = vshrl.u32 2131351028, %v2379
    %v2386 = vor.u32 %v2384, %v2385
    %v2387 = vshll.u32 2131351028, %v2378
    %v2388 = vshrl.u32 2102212464, %v2379
    %v2389 = vor.u32 %v2387, %v2388
    %v2390 = vshll.u32 2102212464, %v2378
    %v2391 = vshrl.u32 920167782, %v2379
    %v2392 = vor.u32 %v2390, %v2391
    %v2393 = vshll.u32 920167782, %v2378
    %v2394 = vshrl.u32 1326507024, %v2379
    %v2395 = vor.u32 %v2393, %v2394
    %vm2396 = vcmp.lt.s32.totalorder %v2377, 1
    %vm2397 = vcmp.lt.s32.totalorder %v2377, 2
    %vm2398 = vcmp.lt.s32.totalorder %v2377, 3
    %vm2399 = vcmp.lt.s32.totalorder %v2377, 4
    %v2400 = vsel %vm2396, %v2380, %v2383
    %v2401 = vsel %vm2399, %v2389, 2102212464
    %v2402 = vsel %vm2398, %v2386, %v2401
    %v2403 = vsel %vm2397, %v2400, %v2402
    %v2404 = vsel %vm2396, %v2383, %v2386
    %v2405 = vsel %vm2399, %v2392, 920167782
    %v2406 = vsel %vm2398, %v2389, %v2405
    %v2407 = vsel %vm2397, %v2404, %v2406
    %v2408 = vsel %vm2396, %v2386, %v2389
    %v2409 = vsel %vm2399, %v2395, 1326507024
    %v2410 = vsel %vm2398, %v2392, %v2409
    %v2411 = vsel %vm2397, %v2408, %v2410
    %v2412 = vshll.u32 %v2372, 8
    %v2413 = vmul.u32.u64.compose %v2412, %v2411
    %v2414 = vextract.low.u32 %v2413
    %v2415 = vextract.high.u32 %v2413
    %v2416 = vmul.u32.u64.compose %v2412, %v2407
    %v2417 = vextract.low.u32 %v2416
    %v2418 = vextract.high.u32 %v2416
    %v2419 = vmul.u32 %v2412, %v2403
    %v2420 = vadd.s32 %v2415, %v2417
    %vm2421 = vc.u32 %v2415, %v2417
    %v2422 = vadd.s32 %v2418, 1
    %v2423 = vsel %vm2421, %v2422, %v2418
    %v2424 = vadd.s32 %v2419, %v2423
    %v2425 = vadd.s32 %v2424, 536870912
    %v2426 = vshrl.u32 %v2425, 30
    %v2427 = vshll.u32 %v2426, 30
    %v2428 = vsub.s32 %v2424, %v2427
    %vm2429 = vcmp.lt.s32.totalorder %v2428, 0
    %v2430 = vsub.s32 0, %v2428
    %v2431 = vsel %vm2429, %v2430, %v2428
    %v2432 = vclz %v2431
    %v2433 = vsub.s32 %v2432, 2
    %vm2434 = vcmp.gt.s32.totalorder 0, %v2433
    %v2435 = vsel %vm2434, 0, %v2433
    %v2436 = vsub.s32 32, %v2435
    %v2437 = vshll.u32 %v2428, %v2435
    %v2438 = vshrl.u32 %v2420, %v2436
    %v2439 = vor.u32 %v2437, %v2438
    %v2440 = vsub.s32 4294967266, %v2435
    %v2441 = vadd.s32 %v2440, 127
    %v2442 = vshll.u32 %v2441, 23
    %v2443 = vor.u32 4788187, %v2442
    %v2444 = vand.u32 2147483647, %v2443
    %v2446 = vcvt.s32.f32 %v2439
    %v2447 = vmul.f32 %v2446, %v2444
    %v2448 = vxor.u32 %v2447, 2147483648
    %v2449 = vsel %vm2366, %v2448, %v2447
    %v2450 = vsub.s32 4, %v2426
    %v2451 = vsel %vm2366, %v2450, %v2426
    %v2452 = vsel %vm2365, %v2356, %v2449
    %v2453 = vsel %vm2365, 0, %v2451
    %v2454 = vcosq.f32.pop %v2452
    %v2455 = vsinq.f32.pop %v2452
    %vm2456 = vweird.f32 %v2356
    %v2457 = vand.u32 %v2453, 3
    %vm2458 = vcmp.lt.s32.totalorder %v2457, 2
    %vm2459 = vcmp.eq.s32.totalorder %v2457, 0
    %v2460 = vxor.u32 %v2455, 2147483648
    %v2461 = vsel %vm2459, %v2454, %v2460
    %vm2462 = vcmp.eq.s32.totalorder %v2457, 2
    %v2463 = vxor.u32 %v2454, 2147483648
    %v2464 = vsel %vm2462, %v2463, %v2455
    %v2465 = vsel %vm2458, %v2461, %v2464
    %v2466 = vsel %vm2456, nan, %v2465
    %v2467 = vand.u32 2147483647, %v2357
    %vm2468 = vcmp.le.f32.partialorder %v2467, 0.7853982
    %vm2469 = vcmp.lt.s32.totalorder %v2357, 0
    %v2470 = vand.u32 %v2357, 2139095040
    %v2471 = vshrl.u32 %v2470, 23
    %v2472 = vsub.s32 %v2471, 127
    %v2473 = vand.u32 2147483647, %v2357
    %v2474 = vand.u32 %v2473, 8388607
    %v2475 = vor.u32 %v2474, 8388608
    %v2476 = vsub.s32 0, %v2475
    %v2477 = vadd.s32 %v2472, 1
    %vm2478 = vcmp.gt.s32.totalorder %v2477, 0
    %v2479 = vsel %vm2478, %v2477, 0
    %v2480 = vshrl.u32 %v2479, 5
    %v2481 = vand.u32 %v2479, 31
    %v2482 = vsub.s32 32, %v2481
    %v2483 = vshrl.u32 683565275, %v2482
    %v2484 = vshll.u32 683565275, %v2481
    %v2485 = vshrl.u32 2475754826, %v2482
    %v2486 = vor.u32 %v2484, %v2485
    %v2487 = vshll.u32 2475754826, %v2481
    %v2488 = vshrl.u32 2131351028, %v2482
    %v2489 = vor.u32 %v2487, %v2488
    %v2490 = vshll.u32 2131351028, %v2481
    %v2491 = vshrl.u32 2102212464, %v2482
    %v2492 = vor.u32 %v2490, %v2491
    %v2493 = vshll.u32 2102212464, %v2481
    %v2494 = vshrl.u32 920167782, %v2482
    %v2495 = vor.u32 %v2493, %v2494
    %v2496 = vshll.u32 920167782, %v2481
    %v2497 = vshrl.u32 1326507024, %v2482
    %v2498 = vor.u32 %v2496, %v2497
    %vm2499 = vcmp.lt.s32.totalorder %v2480, 1
    %vm2500 = vcmp.lt.s32.totalorder %v2480, 2
    %vm2501 = vcmp.lt.s32.totalorder %v2480, 3
    %vm2502 = vcmp.lt.s32.totalorder %v2480, 4
    %v2503 = vsel %vm2499, %v2483, %v2486
    %v2504 = vsel %vm2502, %v2492, 2102212464
    %v2505 = vsel %vm2501, %v2489, %v2504
    %v2506 = vsel %vm2500, %v2503, %v2505
    %v2507 = vsel %vm2499, %v2486, %v2489
    %v2508 = vsel %vm2502, %v2495, 920167782
    %v2509 = vsel %vm2501, %v2492, %v2508
    %v2510 = vsel %vm2500, %v2507, %v2509
    %v2511 = vsel %vm2499, %v2489, %v2492
    %v2512 = vsel %vm2502, %v2498, 1326507024
    %v2513 = vsel %vm2501, %v2495, %v2512
    %v2514 = vsel %vm2500, %v2511, %v2513
    %v2515 = vshll.u32 %v2475, 8
    %v2516 = vmul.u32.u64.compose %v2515, %v2514
    %v2517 = vextract.low.u32 %v2516
    %v2518 = vextract.high.u32 %v2516
    %v2519 = vmul.u32.u64.compose %v2515, %v2510
    %v2520 = vextract.low.u32 %v2519
    %v2521 = vextract.high.u32 %v2519
    %v2522 = vmul.u32 %v2515, %v2506
    %v2523 = vadd.s32 %v2518, %v2520
    %vm2524 = vc.u32 %v2518, %v2520
    %v2525 = vadd.s32 %v2521, 1
    %v2526 = vsel %vm2524, %v2525, %v2521
    %v2527 = vadd.s32 %v2522, %v2526
    %v2528 = vadd.s32 %v2527, 536870912
    %v2529 = vshrl.u32 %v2528, 30
    %v2530 = vshll.u32 %v2529, 30
    %v2531 = vsub.s32 %v2527, %v2530
    %vm2532 = vcmp.lt.s32.totalorder %v2531, 0
    %v2533 = vsub.s32 0, %v2531
    %v2534 = vsel %vm2532, %v2533, %v2531
    %v2535 = vclz %v2534
    %v2536 = vsub.s32 %v2535, 2
    %vm2537 = vcmp.gt.s32.totalorder 0, %v2536
    %v2538 = vsel %vm2537, 0, %v2536
    %v2539 = vsub.s32 32, %v2538
    %v2540 = vshll.u32 %v2531, %v2538
    %v2541 = vshrl.u32 %v2523, %v2539
    %v2542 = vor.u32 %v2540, %v2541
    %v2543 = vsub.s32 4294967266, %v2538
    %v2544 = vadd.s32 %v2543, 127
    %v2545 = vshll.u32 %v2544, 23
    %v2546 = vor.u32 4788187, %v2545
    %v2547 = vand.u32 2147483647, %v2546
    %v2549 = vcvt.s32.f32 %v2542
    %v2550 = vmul.f32 %v2549, %v2547
    %v2551 = vxor.u32 %v2550, 2147483648
    %v2552 = vsel %vm2469, %v2551, %v2550
    %v2553 = vsub.s32 4, %v2529
    %v2554 = vsel %vm2469, %v2553, %v2529
    %v2555 = vsel %vm2468, %v2357, %v2552
    %v2556 = vsel %vm2468, 0, %v2554
    %v2557 = vcosq.f32.pop %v2555
    %v2558 = vsinq.f32.pop %v2555
    %vm2559 = vweird.f32 %v2357
    %v2560 = vand.u32 %v2556, 3
    %vm2561 = vcmp.lt.s32.totalorder %v2560, 2
    %vm2562 = vcmp.eq.s32.totalorder %v2560, 0
    %v2563 = vxor.u32 %v2558, 2147483648
    %v2564 = vsel %vm2562, %v2557, %v2563
    %vm2565 = vcmp.eq.s32.totalorder %v2560, 2
    %v2566 = vxor.u32 %v2557, 2147483648
    %v2567 = vsel %vm2565, %v2566, %v2558
    %v2568 = vsel %vm2561, %v2564, %v2567
    %v2569 = vsel %vm2559, nan, %v2568
    %v2570 = vand.u32 2147483647, %v2358
    %vm2571 = vcmp.le.f32.partialorder %v2570, 0.7853982
    %vm2572 = vcmp.lt.s32.totalorder %v2358, 0
    %v2573 = vand.u32 %v2358, 2139095040
    %v2574 = vshrl.u32 %v2573, 23
    %v2575 = vsub.s32 %v2574, 127
    %v2576 = vand.u32 2147483647, %v2358
    %v2577 = vand.u32 %v2576, 8388607
    %v2578 = vor.u32 %v2577, 8388608
    %v2579 = vsub.s32 0, %v2578
    %v2580 = vadd.s32 %v2575, 1
    %vm2581 = vcmp.gt.s32.totalorder %v2580, 0
    %v2582 = vsel %vm2581, %v2580, 0
    %v2583 = vshrl.u32 %v2582, 5
    %v2584 = vand.u32 %v2582, 31
    %v2585 = vsub.s32 32, %v2584
    %v2586 = vshrl.u32 683565275, %v2585
    %v2587 = vshll.u32 683565275, %v2584
    %v2588 = vshrl.u32 2475754826, %v2585
    %v2589 = vor.u32 %v2587, %v2588
    %v2590 = vshll.u32 2475754826, %v2584
    %v2591 = vshrl.u32 2131351028, %v2585
    %v2592 = vor.u32 %v2590, %v2591
    %v2593 = vshll.u32 2131351028, %v2584
    %v2594 = vshrl.u32 2102212464, %v2585
    %v2595 = vor.u32 %v2593, %v2594
    %v2596 = vshll.u32 2102212464, %v2584
    %v2597 = vshrl.u32 920167782, %v2585
    %v2598 = vor.u32 %v2596, %v2597
    %v2599 = vshll.u32 920167782, %v2584
    %v2600 = vshrl.u32 1326507024, %v2585
    %v2601 = vor.u32 %v2599, %v2600
    %vm2602 = vcmp.lt.s32.totalorder %v2583, 1
    %vm2603 = vcmp.lt.s32.totalorder %v2583, 2
    %vm2604 = vcmp.lt.s32.totalorder %v2583, 3
    %vm2605 = vcmp.lt.s32.totalorder %v2583, 4
    %v2606 = vsel %vm2602, %v2586, %v2589
    %v2607 = vsel %vm2605, %v2595, 2102212464
    %v2608 = vsel %vm2604, %v2592, %v2607
    %v2609 = vsel %vm2603, %v2606, %v2608
    %v2610 = vsel %vm2602, %v2589, %v2592
    %v2611 = vsel %vm2605, %v2598, 920167782
    %v2612 = vsel %vm2604, %v2595, %v2611
    %v2613 = vsel %vm2603, %v2610, %v2612
    %v2614 = vsel %vm2602, %v2592, %v2595
    %v2615 = vsel %vm2605, %v2601, 1326507024
    %v2616 = vsel %vm2604, %v2598, %v2615
    %v2617 = vsel %vm2603, %v2614, %v2616
    %v2618 = vshll.u32 %v2578, 8
    %v2619 = vmul.u32.u64.compose %v2618, %v2617
    %v2620 = vextract.low.u32 %v2619
    %v2621 = vextract.high.u32 %v2619
    %v2622 = vmul.u32.u64.compose %v2618, %v2613
    %v2623 = vextract.low.u32 %v2622
    %v2624 = vextract.high.u32 %v2622
    %v2625 = vmul.u32 %v2618, %v2609
    %v2626 = vadd.s32 %v2621, %v2623
    %vm2627 = vc.u32 %v2621, %v2623
    %v2628 = vadd.s32 %v2624, 1
    %v2629 = vsel %vm2627, %v2628, %v2624
    %v2630 = vadd.s32 %v2625, %v2629
    %v2631 = vadd.s32 %v2630, 536870912
    %v2632 = vshrl.u32 %v2631, 30
    %v2633 = vshll.u32 %v2632, 30
    %v2634 = vsub.s32 %v2630, %v2633
    %vm2635 = vcmp.lt.s32.totalorder %v2634, 0
    %v2636 = vsub.s32 0, %v2634
    %v2637 = vsel %vm2635, %v2636, %v2634
    %v2638 = vclz %v2637
    %v2639 = vsub.s32 %v2638, 2
    %vm2640 = vcmp.gt.s32.totalorder 0, %v2639
    %v2641 = vsel %vm2640, 0, %v2639
    %v2642 = vsub.s32 32, %v2641
    %v2643 = vshll.u32 %v2634, %v2641
    %v2644 = vshrl.u32 %v2626, %v2642
    %v2645 = vor.u32 %v2643, %v2644
    %v2646 = vsub.s32 4294967266, %v2641
    %v2647 = vadd.s32 %v2646, 127
    %v2648 = vshll.u32 %v2647, 23
    %v2649 = vor.u32 4788187, %v2648
    %v2650 = vand.u32 2147483647, %v2649
    %v2652 = vcvt.s32.f32 %v2645
    %v2653 = vmul.f32 %v2652, %v2650
    %v2654 = vxor.u32 %v2653, 2147483648
    %v2655 = vsel %vm2572, %v2654, %v2653
    %v2656 = vsub.s32 4, %v2632
    %v2657 = vsel %vm2572, %v2656, %v2632
    %v2658 = vsel %vm2571, %v2358, %v2655
    %v2659 = vsel %vm2571, 0, %v2657
    %v2660 = vcosq.f32.pop %v2658
    %v2661 = vsinq.f32.pop %v2658
    %vm2662 = vweird.f32 %v2358
    %v2663 = vand.u32 %v2659, 3
    %vm2664 = vcmp.lt.s32.totalorder %v2663, 2
    %vm2665 = vcmp.eq.s32.totalorder %v2663, 0
    %v2666 = vxor.u32 %v2661, 2147483648
    %v2667 = vsel %vm2665, %v2660, %v2666
    %vm2668 = vcmp.eq.s32.totalorder %v2663, 2
    %v2669 = vxor.u32 %v2660, 2147483648
    %v2670 = vsel %vm2668, %v2669, %v2661
    %v2671 = vsel %vm2664, %v2667, %v2670
    %v2672 = vsel %vm2662, nan, %v2671
    %v2673 = vand.u32 2147483647, %v2359
    %vm2674 = vcmp.le.f32.partialorder %v2673, 0.7853982
    %vm2675 = vcmp.lt.s32.totalorder %v2359, 0
    %v2676 = vand.u32 %v2359, 2139095040
    %v2677 = vshrl.u32 %v2676, 23
    %v2678 = vsub.s32 %v2677, 127
    %v2679 = vand.u32 2147483647, %v2359
    %v2680 = vand.u32 %v2679, 8388607
    %v2681 = vor.u32 %v2680, 8388608
    %v2682 = vsub.s32 0, %v2681
    %v2683 = vadd.s32 %v2678, 1
    %vm2684 = vcmp.gt.s32.totalorder %v2683, 0
    %v2685 = vsel %vm2684, %v2683, 0
    %v2686 = vshrl.u32 %v2685, 5
    %v2687 = vand.u32 %v2685, 31
    %v2688 = vsub.s32 32, %v2687
    %v2689 = vshrl.u32 683565275, %v2688
    %v2690 = vshll.u32 683565275, %v2687
    %v2691 = vshrl.u32 2475754826, %v2688
    %v2692 = vor.u32 %v2690, %v2691
    %v2693 = vshll.u32 2475754826, %v2687
    %v2694 = vshrl.u32 2131351028, %v2688
    %v2695 = vor.u32 %v2693, %v2694
    %v2696 = vshll.u32 2131351028, %v2687
    %v2697 = vshrl.u32 2102212464, %v2688
    %v2698 = vor.u32 %v2696, %v2697
    %v2699 = vshll.u32 2102212464, %v2687
    %v2700 = vshrl.u32 920167782, %v2688
    %v2701 = vor.u32 %v2699, %v2700
    %v2702 = vshll.u32 920167782, %v2687
    %v2703 = vshrl.u32 1326507024, %v2688
    %v2704 = vor.u32 %v2702, %v2703
    %vm2705 = vcmp.lt.s32.totalorder %v2686, 1
    %vm2706 = vcmp.lt.s32.totalorder %v2686, 2
    %vm2707 = vcmp.lt.s32.totalorder %v2686, 3
    %vm2708 = vcmp.lt.s32.totalorder %v2686, 4
    %v2709 = vsel %vm2705, %v2689, %v2692
    %v2710 = vsel %vm2708, %v2698, 2102212464
    %v2711 = vsel %vm2707, %v2695, %v2710
    %v2712 = vsel %vm2706, %v2709, %v2711
    %v2713 = vsel %vm2705, %v2692, %v2695
    %v2714 = vsel %vm2708, %v2701, 920167782
    %v2715 = vsel %vm2707, %v2698, %v2714
    %v2716 = vsel %vm2706, %v2713, %v2715
    %v2717 = vsel %vm2705, %v2695, %v2698
    %v2718 = vsel %vm2708, %v2704, 1326507024
    %v2719 = vsel %vm2707, %v2701, %v2718
    %v2720 = vsel %vm2706, %v2717, %v2719
    %v2721 = vshll.u32 %v2681, 8
    %v2722 = vmul.u32.u64.compose %v2721, %v2720
    %v2723 = vextract.low.u32 %v2722
    %v2724 = vextract.high.u32 %v2722
    %v2725 = vmul.u32.u64.compose %v2721, %v2716
    %v2726 = vextract.low.u32 %v2725
    %v2727 = vextract.high.u32 %v2725
    %v2728 = vmul.u32 %v2721, %v2712
    %v2729 = vadd.s32 %v2724, %v2726
    %vm2730 = vc.u32 %v2724, %v2726
    %v2731 = vadd.s32 %v2727, 1
    %v2732 = vsel %vm2730, %v2731, %v2727
    %v2733 = vadd.s32 %v2728, %v2732
    %v2734 = vadd.s32 %v2733, 536870912
    %v2735 = vshrl.u32 %v2734, 30
    %v2736 = vshll.u32 %v2735, 30
    %v2737 = vsub.s32 %v2733, %v2736
    %vm2738 = vcmp.lt.s32.totalorder %v2737, 0
    %v2739 = vsub.s32 0, %v2737
    %v2740 = vsel %vm2738, %v2739, %v2737
    %v2741 = vclz %v2740
    %v2742 = vsub.s32 %v2741, 2
    %vm2743 = vcmp.gt.s32.totalorder 0, %v2742
    %v2744 = vsel %vm2743, 0, %v2742
    %v2745 = vsub.s32 32, %v2744
    %v2746 = vshll.u32 %v2737, %v2744
    %v2747 = vshrl.u32 %v2729, %v2745
    %v2748 = vor.u32 %v2746, %v2747
    %v2749 = vsub.s32 4294967266, %v2744
    %v2750 = vadd.s32 %v2749, 127
    %v2751 = vshll.u32 %v2750, 23
    %v2752 = vor.u32 4788187, %v2751
    %v2753 = vand.u32 2147483647, %v2752
    %v2755 = vcvt.s32.f32 %v2748
    %v2756 = vmul.f32 %v2755, %v2753
    %v2757 = vxor.u32 %v2756, 2147483648
    %v2758 = vsel %vm2675, %v2757, %v2756
    %v2759 = vsub.s32 4, %v2735
    %v2760 = vsel %vm2675, %v2759, %v2735
    %v2761 = vsel %vm2674, %v2359, %v2758
    %v2762 = vsel %vm2674, 0, %v2760
    %v2763 = vcosq.f32.pop %v2761
    %v2764 = vsinq.f32.pop %v2761
    %vm2765 = vweird.f32 %v2359
    %v2766 = vand.u32 %v2762, 3
    %vm2767 = vcmp.lt.s32.totalorder %v2766, 2
    %vm2768 = vcmp.eq.s32.totalorder %v2766, 0
    %v2769 = vxor.u32 %v2764, 2147483648
    %v2770 = vsel %vm2768, %v2763, %v2769
    %vm2771 = vcmp.eq.s32.totalorder %v2766, 2
    %v2772 = vxor.u32 %v2763, 2147483648
    %v2773 = vsel %vm2771, %v2772, %v2764
    %v2774 = vsel %vm2767, %v2770, %v2773
    %v2775 = vsel %vm2765, nan, %v2774
    %v2776 = vand.u32 2147483647, %v2360
    %vm2777 = vcmp.le.f32.partialorder %v2776, 0.7853982
    %vm2778 = vcmp.lt.s32.totalorder %v2360, 0
    %v2779 = vand.u32 %v2360, 2139095040
    %v2780 = vshrl.u32 %v2779, 23
    %v2781 = vsub.s32 %v2780, 127
    %v2782 = vand.u32 2147483647, %v2360
    %v2783 = vand.u32 %v2782, 8388607
    %v2784 = vor.u32 %v2783, 8388608
    %v2785 = vsub.s32 0, %v2784
    %v2786 = vadd.s32 %v2781, 1
    %vm2787 = vcmp.gt.s32.totalorder %v2786, 0
    %v2788 = vsel %vm2787, %v2786, 0
    %v2789 = vshrl.u32 %v2788, 5
    %v2790 = vand.u32 %v2788, 31
    %v2791 = vsub.s32 32, %v2790
    %v2792 = vshrl.u32 683565275, %v2791
    %v2793 = vshll.u32 683565275, %v2790
    %v2794 = vshrl.u32 2475754826, %v2791
    %v2795 = vor.u32 %v2793, %v2794
    %v2796 = vshll.u32 2475754826, %v2790
    %v2797 = vshrl.u32 2131351028, %v2791
    %v2798 = vor.u32 %v2796, %v2797
    %v2799 = vshll.u32 2131351028, %v2790
    %v2800 = vshrl.u32 2102212464, %v2791
    %v2801 = vor.u32 %v2799, %v2800
    %v2802 = vshll.u32 2102212464, %v2790
    %v2803 = vshrl.u32 920167782, %v2791
    %v2804 = vor.u32 %v2802, %v2803
    %v2805 = vshll.u32 920167782, %v2790
    %v2806 = vshrl.u32 1326507024, %v2791
    %v2807 = vor.u32 %v2805, %v2806
    %vm2808 = vcmp.lt.s32.totalorder %v2789, 1
    %vm2809 = vcmp.lt.s32.totalorder %v2789, 2
    %vm2810 = vcmp.lt.s32.totalorder %v2789, 3
    %vm2811 = vcmp.lt.s32.totalorder %v2789, 4
    %v2812 = vsel %vm2808, %v2792, %v2795
    %v2813 = vsel %vm2811, %v2801, 2102212464
    %v2814 = vsel %vm2810, %v2798, %v2813
    %v2815 = vsel %vm2809, %v2812, %v2814
    %v2816 = vsel %vm2808, %v2795, %v2798
    %v2817 = vsel %vm2811, %v2804, 920167782
    %v2818 = vsel %vm2810, %v2801, %v2817
    %v2819 = vsel %vm2809, %v2816, %v2818
    %v2820 = vsel %vm2808, %v2798, %v2801
    %v2821 = vsel %vm2811, %v2807, 1326507024
    %v2822 = vsel %vm2810, %v2804, %v2821
    %v2823 = vsel %vm2809, %v2820, %v2822
    %v2824 = vshll.u32 %v2784, 8
    %v2825 = vmul.u32.u64.compose %v2824, %v2823
    %v2826 = vextract.low.u32 %v2825
    %v2827 = vextract.high.u32 %v2825
    %v2828 = vmul.u32.u64.compose %v2824, %v2819
    %v2829 = vextract.low.u32 %v2828
    %v2830 = vextract.high.u32 %v2828
    %v2831 = vmul.u32 %v2824, %v2815
    %v2832 = vadd.s32 %v2827, %v2829
    %vm2833 = vc.u32 %v2827, %v2829
    %v2834 = vadd.s32 %v2830, 1
    %v2835 = vsel %vm2833, %v2834, %v2830
    %v2836 = vadd.s32 %v2831, %v2835
    %v2837 = vadd.s32 %v2836, 536870912
    %v2838 = vshrl.u32 %v2837, 30
    %v2839 = vshll.u32 %v2838, 30
    %v2840 = vsub.s32 %v2836, %v2839
    %vm2841 = vcmp.lt.s32.totalorder %v2840, 0
    %v2842 = vsub.s32 0, %v2840
    %v2843 = vsel %vm2841, %v2842, %v2840
    %v2844 = vclz %v2843
    %v2845 = vsub.s32 %v2844, 2
    %vm2846 = vcmp.gt.s32.totalorder 0, %v2845
    %v2847 = vsel %vm2846, 0, %v2845
    %v2848 = vsub.s32 32, %v2847
    %v2849 = vshll.u32 %v2840, %v2847
    %v2850 = vshrl.u32 %v2832, %v2848
    %v2851 = vor.u32 %v2849, %v2850
    %v2852 = vsub.s32 4294967266, %v2847
    %v2853 = vadd.s32 %v2852, 127
    %v2854 = vshll.u32 %v2853, 23
    %v2855 = vor.u32 4788187, %v2854
    %v2856 = vand.u32 2147483647, %v2855
    %v2858 = vcvt.s32.f32 %v2851
    %v2859 = vmul.f32 %v2858, %v2856
    %v2860 = vxor.u32 %v2859, 2147483648
    %v2861 = vsel %vm2778, %v2860, %v2859
    %v2862 = vsub.s32 4, %v2838
    %v2863 = vsel %vm2778, %v2862, %v2838
    %v2864 = vsel %vm2777, %v2360, %v2861
    %v2865 = vsel %vm2777, 0, %v2863
    %v2866 = vcosq.f32.pop %v2864
    %v2867 = vsinq.f32.pop %v2864
    %vm2868 = vweird.f32 %v2360
    %v2869 = vand.u32 %v2865, 3
    %vm2870 = vcmp.lt.s32.totalorder %v2869, 2
    %vm2871 = vcmp.eq.s32.totalorder %v2869, 0
    %v2872 = vxor.u32 %v2867, 2147483648
    %v2873 = vsel %vm2871, %v2866, %v2872
    %vm2874 = vcmp.eq.s32.totalorder %v2869, 2
    %v2875 = vxor.u32 %v2866, 2147483648
    %v2876 = vsel %vm2874, %v2875, %v2867
    %v2877 = vsel %vm2870, %v2873, %v2876
    %v2878 = vsel %vm2868, nan, %v2877
    %v2879 = vand.u32 2147483647, %v2361
    %vm2880 = vcmp.le.f32.partialorder %v2879, 0.7853982
    %vm2881 = vcmp.lt.s32.totalorder %v2361, 0
    %v2882 = vand.u32 %v2361, 2139095040
    %v2883 = vshrl.u32 %v2882, 23
    %v2884 = vsub.s32 %v2883, 127
    %v2885 = vand.u32 2147483647, %v2361
    %v2886 = vand.u32 %v2885, 8388607
    %v2887 = vor.u32 %v2886, 8388608
    %v2888 = vsub.s32 0, %v2887
    %v2889 = vadd.s32 %v2884, 1
    %vm2890 = vcmp.gt.s32.totalorder %v2889, 0
    %v2891 = vsel %vm2890, %v2889, 0
    %v2892 = vshrl.u32 %v2891, 5
    %v2893 = vand.u32 %v2891, 31
    %v2894 = vsub.s32 32, %v2893
    %v2895 = vshrl.u32 683565275, %v2894
    %v2896 = vshll.u32 683565275, %v2893
    %v2897 = vshrl.u32 2475754826, %v2894
    %v2898 = vor.u32 %v2896, %v2897
    %v2899 = vshll.u32 2475754826, %v2893
    %v2900 = vshrl.u32 2131351028, %v2894
    %v2901 = vor.u32 %v2899, %v2900
    %v2902 = vshll.u32 2131351028, %v2893
    %v2903 = vshrl.u32 2102212464, %v2894
    %v2904 = vor.u32 %v2902, %v2903
    %v2905 = vshll.u32 2102212464, %v2893
    %v2906 = vshrl.u32 920167782, %v2894
    %v2907 = vor.u32 %v2905, %v2906
    %v2908 = vshll.u32 920167782, %v2893
    %v2909 = vshrl.u32 1326507024, %v2894
    %v2910 = vor.u32 %v2908, %v2909
    %vm2911 = vcmp.lt.s32.totalorder %v2892, 1
    %vm2912 = vcmp.lt.s32.totalorder %v2892, 2
    %vm2913 = vcmp.lt.s32.totalorder %v2892, 3
    %vm2914 = vcmp.lt.s32.totalorder %v2892, 4
    %v2915 = vsel %vm2911, %v2895, %v2898
    %v2916 = vsel %vm2914, %v2904, 2102212464
    %v2917 = vsel %vm2913, %v2901, %v2916
    %v2918 = vsel %vm2912, %v2915, %v2917
    %v2919 = vsel %vm2911, %v2898, %v2901
    %v2920 = vsel %vm2914, %v2907, 920167782
    %v2921 = vsel %vm2913, %v2904, %v2920
    %v2922 = vsel %vm2912, %v2919, %v2921
    %v2923 = vsel %vm2911, %v2901, %v2904
    %v2924 = vsel %vm2914, %v2910, 1326507024
    %v2925 = vsel %vm2913, %v2907, %v2924
    %v2926 = vsel %vm2912, %v2923, %v2925
    %v2927 = vshll.u32 %v2887, 8
    %v2928 = vmul.u32.u64.compose %v2927, %v2926
    %v2929 = vextract.low.u32 %v2928
    %v2930 = vextract.high.u32 %v2928
    %v2931 = vmul.u32.u64.compose %v2927, %v2922
    %v2932 = vextract.low.u32 %v2931
    %v2933 = vextract.high.u32 %v2931
    %v2934 = vmul.u32 %v2927, %v2918
    %v2935 = vadd.s32 %v2930, %v2932
    %vm2936 = vc.u32 %v2930, %v2932
    %v2937 = vadd.s32 %v2933, 1
    %v2938 = vsel %vm2936, %v2937, %v2933
    %v2939 = vadd.s32 %v2934, %v2938
    %v2940 = vadd.s32 %v2939, 536870912
    %v2941 = vshrl.u32 %v2940, 30
    %v2942 = vshll.u32 %v2941, 30
    %v2943 = vsub.s32 %v2939, %v2942
    %vm2944 = vcmp.lt.s32.totalorder %v2943, 0
    %v2945 = vsub.s32 0, %v2943
    %v2946 = vsel %vm2944, %v2945, %v2943
    %v2947 = vclz %v2946
    %v2948 = vsub.s32 %v2947, 2
    %vm2949 = vcmp.gt.s32.totalorder 0, %v2948
    %v2950 = vsel %vm2949, 0, %v2948
    %v2951 = vsub.s32 32, %v2950
    %v2952 = vshll.u32 %v2943, %v2950
    %v2953 = vshrl.u32 %v2935, %v2951
    %v2954 = vor.u32 %v2952, %v2953
    %v2955 = vsub.s32 4294967266, %v2950
    %v2956 = vadd.s32 %v2955, 127
    %v2957 = vshll.u32 %v2956, 23
    %v2958 = vor.u32 4788187, %v2957
    %v2959 = vand.u32 2147483647, %v2958
    %v2961 = vcvt.s32.f32 %v2954
    %v2962 = vmul.f32 %v2961, %v2959
    %v2963 = vxor.u32 %v2962, 2147483648
    %v2964 = vsel %vm2881, %v2963, %v2962
    %v2965 = vsub.s32 4, %v2941
    %v2966 = vsel %vm2881, %v2965, %v2941
    %v2967 = vsel %vm2880, %v2361, %v2964
    %v2968 = vsel %vm2880, 0, %v2966
    %v2969 = vcosq.f32.pop %v2967
    %v2970 = vsinq.f32.pop %v2967
    %vm2971 = vweird.f32 %v2361
    %v2972 = vand.u32 %v2968, 3
    %vm2973 = vcmp.lt.s32.totalorder %v2972, 2
    %vm2974 = vcmp.eq.s32.totalorder %v2972, 0
    %v2975 = vxor.u32 %v2970, 2147483648
    %v2976 = vsel %vm2974, %v2969, %v2975
    %vm2977 = vcmp.eq.s32.totalorder %v2972, 2
    %v2978 = vxor.u32 %v2969, 2147483648
    %v2979 = vsel %vm2977, %v2978, %v2970
    %v2980 = vsel %vm2973, %v2976, %v2979
    %v2981 = vsel %vm2971, nan, %v2980
    %v2982 = vand.u32 2147483647, %v2362
    %vm2983 = vcmp.le.f32.partialorder %v2982, 0.7853982
    %vm2984 = vcmp.lt.s32.totalorder %v2362, 0
    %v2985 = vand.u32 %v2362, 2139095040
    %v2986 = vshrl.u32 %v2985, 23
    %v2987 = vsub.s32 %v2986, 127
    %v2988 = vand.u32 2147483647, %v2362
    %v2989 = vand.u32 %v2988, 8388607
    %v2990 = vor.u32 %v2989, 8388608
    %v2991 = vsub.s32 0, %v2990
    %v2992 = vadd.s32 %v2987, 1
    %vm2993 = vcmp.gt.s32.totalorder %v2992, 0
    %v2994 = vsel %vm2993, %v2992, 0
    %v2995 = vshrl.u32 %v2994, 5
    %v2996 = vand.u32 %v2994, 31
    %v2997 = vsub.s32 32, %v2996
    %v2998 = vshrl.u32 683565275, %v2997
    %v2999 = vshll.u32 683565275, %v2996
    %v3000 = vshrl.u32 2475754826, %v2997
    %v3001 = vor.u32 %v2999, %v3000
    %v3002 = vshll.u32 2475754826, %v2996
    %v3003 = vshrl.u32 2131351028, %v2997
    %v3004 = vor.u32 %v3002, %v3003
    %v3005 = vshll.u32 2131351028, %v2996
    %v3006 = vshrl.u32 2102212464, %v2997
    %v3007 = vor.u32 %v3005, %v3006
    %v3008 = vshll.u32 2102212464, %v2996
    %v3009 = vshrl.u32 920167782, %v2997
    %v3010 = vor.u32 %v3008, %v3009
    %v3011 = vshll.u32 920167782, %v2996
    %v3012 = vshrl.u32 1326507024, %v2997
    %v3013 = vor.u32 %v3011, %v3012
    %vm3014 = vcmp.lt.s32.totalorder %v2995, 1
    %vm3015 = vcmp.lt.s32.totalorder %v2995, 2
    %vm3016 = vcmp.lt.s32.totalorder %v2995, 3
    %vm3017 = vcmp.lt.s32.totalorder %v2995, 4
    %v3018 = vsel %vm3014, %v2998, %v3001
    %v3019 = vsel %vm3017, %v3007, 2102212464
    %v3020 = vsel %vm3016, %v3004, %v3019
    %v3021 = vsel %vm3015, %v3018, %v3020
    %v3022 = vsel %vm3014, %v3001, %v3004
    %v3023 = vsel %vm3017, %v3010, 920167782
    %v3024 = vsel %vm3016, %v3007, %v3023
    %v3025 = vsel %vm3015, %v3022, %v3024
    %v3026 = vsel %vm3014, %v3004, %v3007
    %v3027 = vsel %vm3017, %v3013, 1326507024
    %v3028 = vsel %vm3016, %v3010, %v3027
    %v3029 = vsel %vm3015, %v3026, %v3028
    %v3030 = vshll.u32 %v2990, 8
    %v3031 = vmul.u32.u64.compose %v3030, %v3029
    %v3032 = vextract.low.u32 %v3031
    %v3033 = vextract.high.u32 %v3031
    %v3034 = vmul.u32.u64.compose %v3030, %v3025
    %v3035 = vextract.low.u32 %v3034
    %v3036 = vextract.high.u32 %v3034
    %v3037 = vmul.u32 %v3030, %v3021
    %v3038 = vadd.s32 %v3033, %v3035
    %vm3039 = vc.u32 %v3033, %v3035
    %v3040 = vadd.s32 %v3036, 1
    %v3041 = vsel %vm3039, %v3040, %v3036
    %v3042 = vadd.s32 %v3037, %v3041
    %v3043 = vadd.s32 %v3042, 536870912
    %v3044 = vshrl.u32 %v3043, 30
    %v3045 = vshll.u32 %v3044, 30
    %v3046 = vsub.s32 %v3042, %v3045
    %vm3047 = vcmp.lt.s32.totalorder %v3046, 0
    %v3048 = vsub.s32 0, %v3046
    %v3049 = vsel %vm3047, %v3048, %v3046
    %v3050 = vclz %v3049
    %v3051 = vsub.s32 %v3050, 2
    %vm3052 = vcmp.gt.s32.totalorder 0, %v3051
    %v3053 = vsel %vm3052, 0, %v3051
    %v3054 = vsub.s32 32, %v3053
    %v3055 = vshll.u32 %v3046, %v3053
    %v3056 = vshrl.u32 %v3038, %v3054
    %v3057 = vor.u32 %v3055, %v3056
    %v3058 = vsub.s32 4294967266, %v3053
    %v3059 = vadd.s32 %v3058, 127
    %v3060 = vshll.u32 %v3059, 23
    %v3061 = vor.u32 4788187, %v3060
    %v3062 = vand.u32 2147483647, %v3061
    %v3064 = vcvt.s32.f32 %v3057
    %v3065 = vmul.f32 %v3064, %v3062
    %v3066 = vxor.u32 %v3065, 2147483648
    %v3067 = vsel %vm2984, %v3066, %v3065
    %v3068 = vsub.s32 4, %v3044
    %v3069 = vsel %vm2984, %v3068, %v3044
    %v3070 = vsel %vm2983, %v2362, %v3067
    %v3071 = vsel %vm2983, 0, %v3069
    %v3072 = vcosq.f32.pop %v3070
    %v3073 = vsinq.f32.pop %v3070
    %vm3074 = vweird.f32 %v2362
    %v3075 = vand.u32 %v3071, 3
    %vm3076 = vcmp.lt.s32.totalorder %v3075, 2
    %vm3077 = vcmp.eq.s32.totalorder %v3075, 0
    %v3078 = vxor.u32 %v3073, 2147483648
    %v3079 = vsel %vm3077, %v3072, %v3078
    %vm3080 = vcmp.eq.s32.totalorder %v3075, 2
    %v3081 = vxor.u32 %v3072, 2147483648
    %v3082 = vsel %vm3080, %v3081, %v3073
    %v3083 = vsel %vm3076, %v3079, %v3082
    %v3084 = vsel %vm3074, nan, %v3083
    %v3085 = vand.u32 2147483647, %v2363
    %vm3086 = vcmp.le.f32.partialorder %v3085, 0.7853982
    %vm3087 = vcmp.lt.s32.totalorder %v2363, 0
    %v3088 = vand.u32 %v2363, 2139095040
    %v3089 = vshrl.u32 %v3088, 23
    %v3090 = vsub.s32 %v3089, 127
    %v3091 = vand.u32 2147483647, %v2363
    %v3092 = vand.u32 %v3091, 8388607
    %v3093 = vor.u32 %v3092, 8388608
    %v3094 = vsub.s32 0, %v3093
    %v3095 = vadd.s32 %v3090, 1
    %vm3096 = vcmp.gt.s32.totalorder %v3095, 0
    %v3097 = vsel %vm3096, %v3095, 0
    %v3098 = vshrl.u32 %v3097, 5
    %v3099 = vand.u32 %v3097, 31
    %v3100 = vsub.s32 32, %v3099
    %v3101 = vshrl.u32 683565275, %v3100
    %v3102 = vshll.u32 683565275, %v3099
    %v3103 = vshrl.u32 2475754826, %v3100
    %v3104 = vor.u32 %v3102, %v3103
    %v3105 = vshll.u32 2475754826, %v3099
    %v3106 = vshrl.u32 2131351028, %v3100
    %v3107 = vor.u32 %v3105, %v3106
    %v3108 = vshll.u32 2131351028, %v3099
    %v3109 = vshrl.u32 2102212464, %v3100
    %v3110 = vor.u32 %v3108, %v3109
    %v3111 = vshll.u32 2102212464, %v3099
    %v3112 = vshrl.u32 920167782, %v3100
    %v3113 = vor.u32 %v3111, %v3112
    %v3114 = vshll.u32 920167782, %v3099
    %v3115 = vshrl.u32 1326507024, %v3100
    %v3116 = vor.u32 %v3114, %v3115
    %vm3117 = vcmp.lt.s32.totalorder %v3098, 1
    %vm3118 = vcmp.lt.s32.totalorder %v3098, 2
    %vm3119 = vcmp.lt.s32.totalorder %v3098, 3
    %vm3120 = vcmp.lt.s32.totalorder %v3098, 4
    %v3121 = vsel %vm3117, %v3101, %v3104
    %v3122 = vsel %vm3120, %v3110, 2102212464
    %v3123 = vsel %vm3119, %v3107, %v3122
    %v3124 = vsel %vm3118, %v3121, %v3123
    %v3125 = vsel %vm3117, %v3104, %v3107
    %v3126 = vsel %vm3120, %v3113, 920167782
    %v3127 = vsel %vm3119, %v3110, %v3126
    %v3128 = vsel %vm3118, %v3125, %v3127
    %v3129 = vsel %vm3117, %v3107, %v3110
    %v3130 = vsel %vm3120, %v3116, 1326507024
    %v3131 = vsel %vm3119, %v3113, %v3130
    %v3132 = vsel %vm3118, %v3129, %v3131
    %v3133 = vshll.u32 %v3093, 8
    %v3134 = vmul.u32.u64.compose %v3133, %v3132
    %v3135 = vextract.low.u32 %v3134
    %v3136 = vextract.high.u32 %v3134
    %v3137 = vmul.u32.u64.compose %v3133, %v3128
    %v3138 = vextract.low.u32 %v3137
    %v3139 = vextract.high.u32 %v3137
    %v3140 = vmul.u32 %v3133, %v3124
    %v3141 = vadd.s32 %v3136, %v3138
    %vm3142 = vc.u32 %v3136, %v3138
    %v3143 = vadd.s32 %v3139, 1
    %v3144 = vsel %vm3142, %v3143, %v3139
    %v3145 = vadd.s32 %v3140, %v3144
    %v3146 = vadd.s32 %v3145, 536870912
    %v3147 = vshrl.u32 %v3146, 30
    %v3148 = vshll.u32 %v3147, 30
    %v3149 = vsub.s32 %v3145, %v3148
    %vm3150 = vcmp.lt.s32.totalorder %v3149, 0
    %v3151 = vsub.s32 0, %v3149
    %v3152 = vsel %vm3150, %v3151, %v3149
    %v3153 = vclz %v3152
    %v3154 = vsub.s32 %v3153, 2
    %vm3155 = vcmp.gt.s32.totalorder 0, %v3154
    %v3156 = vsel %vm3155, 0, %v3154
    %v3157 = vsub.s32 32, %v3156
    %v3158 = vshll.u32 %v3149, %v3156
    %v3159 = vshrl.u32 %v3141, %v3157
    %v3160 = vor.u32 %v3158, %v3159
    %v3161 = vsub.s32 4294967266, %v3156
    %v3162 = vadd.s32 %v3161, 127
    %v3163 = vshll.u32 %v3162, 23
    %v3164 = vor.u32 4788187, %v3163
    %v3165 = vand.u32 2147483647, %v3164
    %v3167 = vcvt.s32.f32 %v3160
    %v3168 = vmul.f32 %v3167, %v3165
    %v3169 = vxor.u32 %v3168, 2147483648
    %v3170 = vsel %vm3087, %v3169, %v3168
    %v3171 = vsub.s32 4, %v3147
    %v3172 = vsel %vm3087, %v3171, %v3147
    %v3173 = vsel %vm3086, %v2363, %v3170
    %v3174 = vsel %vm3086, 0, %v3172
    %v3175 = vcosq.f32.pop %v3173
    %v3176 = vsinq.f32.pop %v3173
    %vm3177 = vweird.f32 %v2363
    %v3178 = vand.u32 %v3174, 3
    %vm3179 = vcmp.lt.s32.totalorder %v3178, 2
    %vm3180 = vcmp.eq.s32.totalorder %v3178, 0
    %v3181 = vxor.u32 %v3176, 2147483648
    %v3182 = vsel %vm3180, %v3175, %v3181
    %vm3183 = vcmp.eq.s32.totalorder %v3178, 2
    %v3184 = vxor.u32 %v3175, 2147483648
    %v3185 = vsel %vm3183, %v3184, %v3176
    %v3186 = vsel %vm3179, %v3182, %v3185
    %v3187 = vsel %vm3177, nan, %v3186
    %3188 = vst [vmem:[#allocation8] sm:$0xff] %v2466
    %3189 = vst [vmem:[#allocation8 + $0x8] sm:$0xff] %v2569
    %3190 = vst [vmem:[#allocation8 + $0x10] sm:$0xff] %v2672
    %3191 = vst [vmem:[#allocation8 + $0x18] sm:$0xff] %v2775
    %3192 = vst [vmem:[#allocation8 + $0x20] sm:$0xff] %v2878
    %3193 = vst [vmem:[#allocation8 + $0x28] sm:$0xff] %v2981
    %3194 = vst [vmem:[#allocation8 + $0x30] sm:$0xff] %v3084
    %3195 = vst [vmem:[#allocation8 + $0x38] sm:$0xff] %v3187
    // Predicated region
    $region30: #{tpu_custom_call.1} parent=1 // pred_check
      _
    $region31: #{tpu_custom_call.1} parent=1 // pred_check_branch
      %3197 = sbr.rel (0) target = $region33
    $region32: #{tpu_custom_call.1} parent=1 // pred_region
      %s3199 = ssub.s32 1024, 1024
      %3200 = vsyncadd [#allocation4], %s3199
      %s3202 = sshll.u32 [#allocation8], 4
      %s3203 = int_to_ptr.vmem [resolvable:$true] %s3202
      %3205 = dma.vmem_to_hbm [thread:$0]  %s3203, 1024, %s4, [#allocation4]
    $region33: #{tpu_custom_call.1} parent=1 // pred_fallthru
      _
    // Predicated region
    $region34: #{tpu_custom_call.1} parent=1 // pred_check
      _
    $region35: #{tpu_custom_call.1} parent=1 // pred_check_branch
      %3207 = sbr.rel (0) target = $region37
    $region36: #{tpu_custom_call.1} parent=1 // pred_region
      %3208 = dma.done [#allocation4], 1024
    $region37: #{tpu_custom_call.1} parent=1 // pred_fallthru
      _
    %3209 = vsyncpa [#allocation3], 1
    %3210 = vsyncpa [#allocation6], 1
    %3211 = vsyncpa [#allocation4], 1

</llo_original>
